<compile_context>
chip_gen: v5e
topology: v5e:2x2
jax: 0.10.0
libtpu: 0.0.40
codegen_flags: <defaults>
</compile_context>

<pallas_src>
import jax
import jax.numpy as jnp
from jax import lax
from jax.experimental import pallas as pl
from jax.experimental.pallas import tpu as pltpu


def _round_up(x, m):
    return ((x + m - 1) // m) * m


def _auto_groups(n):
    """v7x has 2 TensorCores per chip -> present 2 parallel lane groups when the
    batch splits evenly; single-TC chips (v5e/v6e) fold everything into one
    grid step to amortize per-step overhead."""
    if n < 2 or (n % 2) != 0:
        return 1
    try:
        kind = jax.devices()[0].device_kind.lower()
    except Exception:
        return 1
    return 2 if "v7" in kind else 1


def make_kernel(*, Wp, L_out, Cp, Hidp, head, hp_len, is_augmented):
    """Per-lane-group kernel body (all shapes static)."""
    offsets = tuple(dy * Wp + dx for dy in range(3) for dx in range(3))
    shift = head - (Wp + 1)          # lane offset of tap (0,0) inside hp
    tail = hp_len - head - L_out     # multiple of 128 by construction

    def im2col_bf16(xp):
        # xp: (Cp, Lin) f32 -> (9*Cp, L_out) bf16.  Static lane slices +
        # sublane concat (Cp is a multiple of 8); one cast feeding the MXU.
        x1 = jnp.concatenate([xp[:, o:o + L_out] for o in offsets], axis=0)
        return x1.astype(jnp.bfloat16)

    if is_augmented:
        def kernel(xp_ref, wa_ref, b1_ref, w2_ref, b2_ref, mask_ref, out_ref):
            x1 = im2col_bf16(xp_ref[0])                         # (9*Cp, L)
            # fused [conv1 ; physics] matmul on the shared im2col buffer
            acts = jnp.dot(wa_ref[...], x1,
                           preferred_element_type=jnp.float32)  # (Hidp+Cp, L)
            res = acts[Hidp:, :] + b2_ref[...]                  # physics + b2
            # ReLU with the precomputed junk-lane mask folded in (one vmul);
            # the zeroed junk columns/rows double as conv2's zero padding.
            h = jnp.maximum(acts[:Hidp, :] + b1_ref[...], 0.0) * mask_ref[...]
            hb = h.astype(jnp.bfloat16)
            # zero-padded, row-flattened hidden buffer: head / L / tail are all
            # multiples of 128 -> aligned lane concat, no scratch zero-fill.
            hp = jnp.concatenate(
                [jnp.zeros((Hidp, head), jnp.bfloat16), hb,
                 jnp.zeros((Hidp, tail), jnp.bfloat16)], axis=1)  # (Hidp, hp_len)
            # conv2 as 9 accumulating per-tap matmuls (no (9*Hidp, L) im2col).
            for idx, o in enumerate(offsets):
                res = res + jnp.dot(
                    w2_ref[idx], hp[:, shift + o: shift + o + L_out],
                    preferred_element_type=jnp.float32)
            out_ref[0] = res.astype(out_ref.dtype)
        return kernel

    def kernel(xp_ref, wphy_ref, out_ref):
        x1 = im2col_bf16(xp_ref[0])
        out_ref[0] = jnp.dot(wphy_ref[...], x1,
                             preferred_element_type=jnp.float32
                             ).astype(out_ref.dtype)
    return kernel


def derivative_estimator(t, state, params, *, is_augmented=True, groups=None):
    """Pallas forward of DerivativeEstimator.forward(t, state). NCHW in/out."""
    del t  # unused by the reference forward
    w1, b1, w2, b2, d = params      # w1:(Hid,C,3,3) w2:(C,Hid,3,3) OIHW, d:(C,)
    N, C, H, W = state.shape
    Hid = w1.shape[0]

    G = groups if groups is not None else _auto_groups(N)
    if G < 1 or N % G != 0:
        G = 1
    NB = N // G                      # images folded per lane group

    # ---- layout constants (channels on sublanes, flattened rows on lanes) ---
    Cp = _round_up(C, 8)                             # sublane-aligned channels
    Hidp = _round_up(Hid, 8)                         # sublane-aligned hidden
    Wp = W + 2                                       # row stride (>= W+2)
    body = NB * (H + 1) * Wp                         # rows incl. shared pad rows
    L_out = _round_up(body, 128)                     # lane-dense output length
    Lin = _round_up(L_out + 2 * Wp + 2, 128)         # room for the (2,2) tap
    head = _round_up(Wp + 1, 128)                    # aligned hidden interior
    hp_len = head + L_out + _round_up(Wp + 2, 128)   # hidden buffer length
    assert Wp >= W + 2 and head >= Wp + 1 and hp_len - head - L_out >= Wp + 2

    # ---- input glue: NCHW -> (G, Cp, Lin), images folded along lanes --------
    # Each image gets a top pad row; that row also serves as the previous
    # image's bottom pad (shared), and the zero tail pads the last image.
    x = state.astype(jnp.float32).reshape(G, NB, C, H, W)
    xpad = jnp.pad(x, ((0, 0), (0, 0), (0, Cp - C), (1, 0), (1, Wp - 1 - W)))
    xflat = jnp.transpose(xpad, (0, 2, 1, 3, 4)).reshape(G, Cp, body)
    xp = jnp.pad(xflat, ((0, 0), (0, 0), (0, Lin - body)))

    # ---- physics weight: d_c * 5-point Laplacian as (Cp, 9*Cp) linear map ---
    stencil = jnp.array([0., 1., 0., 1., -4., 1., 0., 1., 0.], jnp.float32)
    dpad = jnp.pad(d.astype(jnp.float32), (0, Cp - C))
    wphy = (dpad[:, None, None] * stencil[None, :, None]
            * jnp.eye(Cp, dtype=jnp.float32)[:, None, :]).reshape(Cp, 9 * Cp)

    kernel = make_kernel(Wp=Wp, L_out=L_out, Cp=Cp, Hidp=Hidp, head=head,
                         hp_len=hp_len, is_augmented=is_augmented)

    if is_augmented:
        # conv1 weights (OIHW) -> (Hidp, 9*Cp), tap-major / channel-minor,
        # fused with the physics block; all MXU weights pre-cast to bf16.
        w1f = jnp.transpose(w1.astype(jnp.float32), (0, 2, 3, 1))     # (Hid,3,3,C)
        w1f = jnp.pad(w1f, ((0, Hidp - Hid), (0, 0), (0, 0), (0, Cp - C)))
        w1f = w1f.reshape(Hidp, 9 * Cp)
        wa = jnp.concatenate([w1f, wphy], axis=0).astype(jnp.bfloat16)  # (Hidp+Cp, 9*Cp)
        # conv2 weights as 9 per-tap (Cp, Hidp) blocks, tap order = dy-major.
        w2t = jnp.transpose(w2.astype(jnp.float32), (2, 3, 0, 1))     # (3,3,C,Hid)
        w2t = jnp.pad(w2t, ((0, 0), (0, 0), (0, Cp - C), (0, Hidp - Hid)))
        w2t = w2t.reshape(9, Cp, Hidp).astype(jnp.bfloat16)
        b1p = jnp.pad(b1.astype(jnp.float32), (0, Hidp - Hid)).reshape(Hidp, 1)
        b2p = jnp.pad(b2.astype(jnp.float32), (0, Cp - C)).reshape(Cp, 1)

        # precomputed junk-lane mask: 1 at useful output positions (data cols,
        # data rows, inside the folded body), 0 at pad columns / shared pad
        # rows / tail.  Grid-invariant, folded into the ReLU in-kernel.
        idx = jnp.arange(L_out)
        grow = idx // Wp
        col = idx % Wp
        mask = ((col < W) & (grow % (H + 1) < H) & (grow < NB * (H + 1))
                ).astype(jnp.float32).reshape(1, L_out)

        inputs = (xp, wa, b1p, w2t, b2p, mask)
        in_specs = [
            pl.BlockSpec((1, Cp, Lin), lambda g: (g, 0, 0)),
            pl.BlockSpec((Hidp + Cp, 9 * Cp), lambda g: (0, 0)),
            pl.BlockSpec((Hidp, 1), lambda g: (0, 0)),
            pl.BlockSpec((9, Cp, Hidp), lambda g: (0, 0, 0)),
            pl.BlockSpec((Cp, 1), lambda g: (0, 0)),
            pl.BlockSpec((1, L_out), lambda g: (0, 0)),
        ]
    else:
        inputs = (xp, wphy.astype(jnp.bfloat16))
        in_specs = [
            pl.BlockSpec((1, Cp, Lin), lambda g: (g, 0, 0)),
            pl.BlockSpec((Cp, 9 * Cp), lambda g: (0, 0)),
        ]

    out = pl.pallas_call(
        kernel,
        out_shape=jax.ShapeDtypeStruct((G, Cp, L_out), jnp.float32),
        grid=(G,),
        in_specs=in_specs,
        out_specs=pl.BlockSpec((1, Cp, L_out), lambda g: (g, 0, 0)),
        compiler_params=pltpu.CompilerParams(
            dimension_semantics=("parallel",)),
    )(*inputs)

    # (G, Cp, L_out) is channel-major: strip pad channels, un-fold the images,
    # drop the shared pad rows and the pad columns.
    out = out[:, :C, :body].reshape(G, C, NB, H + 1, Wp)
    out = jnp.transpose(out, (0, 2, 1, 3, 4)).reshape(N, C, H + 1, Wp)
    return out[:, :, :H, :W].astype(state.dtype)


def reference_forward(t, state, params, is_augmented=True):
    """Pure-JAX reference (mirrors the PyTorch module's semantics)."""
    del t
    w1, b1, w2, b2, d = params
    C = state.shape[1]
    dn = ('NCHW', 'OIHW', 'NCHW')
    hi = lax.Precision.HIGHEST

    # model_phy: depthwise Laplacian * d_c  (zero boundary)
    stencil = jnp.array([[0., 1., 0.], [1., -4., 1.], [0., 1., 0.]], jnp.float32)
    lap_w = jnp.zeros((C, 1, 3, 3), jnp.float32) + stencil
    lap = lax.conv_general_dilated(state, lap_w, (1, 1), 'SAME',
                                   dimension_numbers=dn, feature_group_count=C,
                                   precision=hi)
    res_phy = lap * d.reshape(1, C, 1, 1)
    if not is_augmented:
        return res_phy

    # model_aug: Conv -> ReLU -> Conv (padding=1, zero)
    h = lax.conv_general_dilated(state, w1, (1, 1), 'SAME',
                                 dimension_numbers=dn, precision=hi)
    h = jnp.maximum(h + b1.reshape(1, -1, 1, 1), 0.0)
    res_aug = lax.conv_general_dilated(h, w2, (1, 1), 'SAME',
                                       dimension_numbers=dn, precision=hi)
    res_aug = res_aug + b2.reshape(1, -1, 1, 1)
    return res_phy + res_aug


if __name__ == "__main__":
    key = jax.random.PRNGKey(0)
    N, C, H, W, Hid = 2, 4, 16, 16, 32
    ks = jax.random.split(key, 6)

    state = jax.random.normal(ks[0], (N, C, H, W), jnp.float32)
    w1 = jax.random.normal(ks[1], (Hid, C, 3, 3), jnp.float32) * 0.1
    b1 = jax.random.normal(ks[2], (Hid,), jnp.float32) * 0.1
    w2 = jax.random.normal(ks[3], (C, Hid, 3, 3), jnp.float32) * 0.1
    b2 = jax.random.normal(ks[4], (C,), jnp.float32) * 0.1
    d = jax.random.uniform(ks[5], (C,), jnp.float32, minval=0.05, maxval=0.2)
    params = (w1, b1, w2, b2, d)
    t = jnp.float32(0.0)

    # augmented path (phys + aug); bf16 MXU operands with f32 accumulation, so
    # tolerance is sized for bf16 rounding (~3 decimal digits per operand).
    out = jax.block_until_ready(
        derivative_estimator(t, state, params, is_augmented=True))
    ref = jax.block_until_ready(reference_forward(t, state, params, True))
    assert out.shape == state.shape, (out.shape, state.shape)
    err = float(jnp.max(jnp.abs(out - ref)))
    tol = 5e-2 + 2e-2 * float(jnp.max(jnp.abs(ref)))
    if err > tol:
        raise AssertionError(f"augmented mismatch, max abs err = {err}")

    # physics-only path (is_augmented=False)
    out_p = jax.block_until_ready(
        derivative_estimator(t, state, params, is_augmented=False))
    ref_p = jax.block_until_ready(reference_forward(t, state, params, False))
    err_p = float(jnp.max(jnp.abs(out_p - ref_p)))
    tol_p = 2e-2 + 2e-2 * float(jnp.max(jnp.abs(ref_p)))
    if err_p > tol_p:
        raise AssertionError(f"phys-only mismatch, max abs err = {err_p}")

    print("KERNEL_OK")
</pallas_src>

<mosaic_0001>
module attributes {stable_mosaic.version = 11 : i64} {
  func.func @kernel(%arg0: i32, %arg1: memref<1x8x768xf32, #tpu.memory_space<vmem>>, %arg2: memref<40x72xbf16, #tpu.memory_space<vmem>>, %arg3: memref<32x1xf32, #tpu.memory_space<vmem>>, %arg4: memref<9x8x32xbf16, #tpu.memory_space<vmem>>, %arg5: memref<8x1xf32, #tpu.memory_space<vmem>>, %arg6: memref<1x640xf32, #tpu.memory_space<vmem>>, %arg7: memref<1x8x640xf32, #tpu.memory_space<vmem>>) attributes {dimension_semantics = [#tpu.dimension_semantics<parallel>], iteration_bounds = array<i64: 1>, scalar_prefetch = 0 : i64, scratch_operands = 0 : i64, tpu.core_type = #tpu.core_type<tc>, window_params = [{transform_indices = @transform_0, window_bounds = array<i64: 1, 8, 768>}, {pipeline_mode = #tpu.pipeline_mode<synchronous>, transform_indices = @transform_1, window_bounds = array<i64: 40, 72>}, {pipeline_mode = #tpu.pipeline_mode<synchronous>, transform_indices = @transform_2, window_bounds = array<i64: 32, 1>}, {pipeline_mode = #tpu.pipeline_mode<synchronous>, transform_indices = @transform_3, window_bounds = array<i64: 9, 8, 32>}, {pipeline_mode = #tpu.pipeline_mode<synchronous>, transform_indices = @transform_4, window_bounds = array<i64: 8, 1>}, {pipeline_mode = #tpu.pipeline_mode<synchronous>, transform_indices = @transform_5, window_bounds = array<i64: 1, 640>}, {transform_indices = @transform_6, window_bounds = array<i64: 1, 8, 640>}]} {
    %c0 = arith.constant 0 : index
    %c0_0 = arith.constant 0 : index
    %c0_1 = arith.constant 0 : index
    %0 = vector.load %arg1[%c0, %c0_0, %c0_1] : memref<1x8x768xf32, #tpu.memory_space<vmem>>, vector<1x8x768xf32>
    %1 = vector.shape_cast %0 : vector<1x8x768xf32> to vector<8x768xf32>
    %2 = vector.extract_strided_slice %1 {offsets = [0, 0], sizes = [8, 640], strides = [1, 1]} : vector<8x768xf32> to vector<8x640xf32>
    %3 = vector.extract_strided_slice %1 {offsets = [0, 1], sizes = [8, 640], strides = [1, 1]} : vector<8x768xf32> to vector<8x640xf32>
    %4 = vector.extract_strided_slice %1 {offsets = [0, 2], sizes = [8, 640], strides = [1, 1]} : vector<8x768xf32> to vector<8x640xf32>
    %5 = vector.extract_strided_slice %1 {offsets = [0, 18], sizes = [8, 640], strides = [1, 1]} : vector<8x768xf32> to vector<8x640xf32>
    %6 = vector.extract_strided_slice %1 {offsets = [0, 19], sizes = [8, 640], strides = [1, 1]} : vector<8x768xf32> to vector<8x640xf32>
    %7 = vector.extract_strided_slice %1 {offsets = [0, 20], sizes = [8, 640], strides = [1, 1]} : vector<8x768xf32> to vector<8x640xf32>
    %8 = vector.extract_strided_slice %1 {offsets = [0, 36], sizes = [8, 640], strides = [1, 1]} : vector<8x768xf32> to vector<8x640xf32>
    %9 = vector.extract_strided_slice %1 {offsets = [0, 37], sizes = [8, 640], strides = [1, 1]} : vector<8x768xf32> to vector<8x640xf32>
    %10 = vector.extract_strided_slice %1 {offsets = [0, 38], sizes = [8, 640], strides = [1, 1]} : vector<8x768xf32> to vector<8x640xf32>
    %11 = tpu.concatenate %2, %3, %4, %5, %6, %7, %8, %9, %10 in 0 : vector<8x640xf32>, vector<8x640xf32>, vector<8x640xf32>, vector<8x640xf32>, vector<8x640xf32>, vector<8x640xf32>, vector<8x640xf32>, vector<8x640xf32>, vector<8x640xf32> -> vector<72x640xf32>
    %12 = arith.truncf %11 : vector<72x640xf32> to vector<72x640xbf16>
    %c0_2 = arith.constant 0 : index
    %c0_3 = arith.constant 0 : index
    %13 = vector.load %arg2[%c0_2, %c0_3] : memref<40x72xbf16, #tpu.memory_space<vmem>>, vector<40x72xbf16>
    %cst = arith.constant dense<0.000000e+00> : vector<40x640xf32>
    %14 = tpu.matmul %13, %12, %cst {dimension_numbers = #tpu.dot_dimension_numbers<[1], [0], [0], [1], [0, 0, 1, 1], [], []>} : vector<40x72xbf16>, vector<72x640xbf16>, vector<40x640xf32> -> vector<40x640xf32>
    %15 = vector.extract_strided_slice %14 {offsets = [32, 0], sizes = [8, 640], strides = [1, 1]} : vector<40x640xf32> to vector<8x640xf32>
    %c0_4 = arith.constant 0 : index
    %c0_5 = arith.constant 0 : index
    %16 = vector.load %arg5[%c0_4, %c0_5] : memref<8x1xf32, #tpu.memory_space<vmem>>, vector<8x1xf32>
    %17 = vector.broadcast %16 : vector<8x1xf32> to vector<8x640xf32>
    %18 = arith.addf %15, %17 : vector<8x640xf32>
    %19 = vector.extract_strided_slice %14 {offsets = [0, 0], sizes = [32, 640], strides = [1, 1]} : vector<40x640xf32> to vector<32x640xf32>
    %c0_6 = arith.constant 0 : index
    %c0_7 = arith.constant 0 : index
    %20 = vector.load %arg3[%c0_6, %c0_7] : memref<32x1xf32, #tpu.memory_space<vmem>>, vector<32x1xf32>
    %21 = vector.broadcast %20 : vector<32x1xf32> to vector<32x640xf32>
    %22 = arith.addf %19, %21 : vector<32x640xf32>
    %cst_8 = arith.constant 0.000000e+00 : f32
    %23 = vector.broadcast %cst_8 : f32 to vector<32x640xf32>
    %24 = arith.maximumf %22, %23 : vector<32x640xf32>
    %c0_9 = arith.constant 0 : index
    %c0_10 = arith.constant 0 : index
    %25 = vector.load %arg6[%c0_9, %c0_10] : memref<1x640xf32, #tpu.memory_space<vmem>>, vector<1x640xf32>
    %26 = vector.broadcast %25 : vector<1x640xf32> to vector<32x640xf32>
    %27 = arith.mulf %24, %26 : vector<32x640xf32>
    %28 = arith.truncf %27 : vector<32x640xf32> to vector<32x640xbf16>
    %cst_11 = arith.constant 0.000000e+00 : bf16
    %29 = vector.broadcast %cst_11 : bf16 to vector<32x128xbf16>
    %cst_12 = arith.constant 0.000000e+00 : bf16
    %30 = vector.broadcast %cst_12 : bf16 to vector<32x128xbf16>
    %31 = tpu.concatenate %29, %28, %30 in 1 : vector<32x128xbf16>, vector<32x640xbf16>, vector<32x128xbf16> -> vector<32x896xbf16>
    %c0_13 = arith.constant 0 : index
    %c0_14 = arith.constant 0 : index
    %c0_15 = arith.constant 0 : index
    %32 = vector.load %arg4[%c0_13, %c0_14, %c0_15] : memref<9x8x32xbf16, #tpu.memory_space<vmem>>, vector<1x8x32xbf16>
    %33 = vector.shape_cast %32 : vector<1x8x32xbf16> to vector<8x32xbf16>
    %34 = vector.extract_strided_slice %31 {offsets = [0, 109], sizes = [32, 640], strides = [1, 1]} : vector<32x896xbf16> to vector<32x640xbf16>
    %cst_16 = arith.constant dense<0.000000e+00> : vector<8x640xf32>
    %35 = tpu.matmul %33, %34, %cst_16 {dimension_numbers = #tpu.dot_dimension_numbers<[1], [0], [0], [1], [0, 0, 1, 1], [], []>} : vector<8x32xbf16>, vector<32x640xbf16>, vector<8x640xf32> -> vector<8x640xf32>
    %36 = arith.addf %18, %35 : vector<8x640xf32>
    %c1 = arith.constant 1 : index
    %c0_17 = arith.constant 0 : index
    %c0_18 = arith.constant 0 : index
    %37 = vector.load %arg4[%c1, %c0_17, %c0_18] : memref<9x8x32xbf16, #tpu.memory_space<vmem>>, vector<1x8x32xbf16>
    %38 = vector.shape_cast %37 : vector<1x8x32xbf16> to vector<8x32xbf16>
    %39 = vector.extract_strided_slice %31 {offsets = [0, 110], sizes = [32, 640], strides = [1, 1]} : vector<32x896xbf16> to vector<32x640xbf16>
    %cst_19 = arith.constant dense<0.000000e+00> : vector<8x640xf32>
    %40 = tpu.matmul %38, %39, %cst_19 {dimension_numbers = #tpu.dot_dimension_numbers<[1], [0], [0], [1], [0, 0, 1, 1], [], []>} : vector<8x32xbf16>, vector<32x640xbf16>, vector<8x640xf32> -> vector<8x640xf32>
    %41 = arith.addf %36, %40 : vector<8x640xf32>
    %c2 = arith.constant 2 : index
    %c0_20 = arith.constant 0 : index
    %c0_21 = arith.constant 0 : index
    %42 = vector.load %arg4[%c2, %c0_20, %c0_21] : memref<9x8x32xbf16, #tpu.memory_space<vmem>>, vector<1x8x32xbf16>
    %43 = vector.shape_cast %42 : vector<1x8x32xbf16> to vector<8x32xbf16>
    %44 = vector.extract_strided_slice %31 {offsets = [0, 111], sizes = [32, 640], strides = [1, 1]} : vector<32x896xbf16> to vector<32x640xbf16>
    %cst_22 = arith.constant dense<0.000000e+00> : vector<8x640xf32>
    %45 = tpu.matmul %43, %44, %cst_22 {dimension_numbers = #tpu.dot_dimension_numbers<[1], [0], [0], [1], [0, 0, 1, 1], [], []>} : vector<8x32xbf16>, vector<32x640xbf16>, vector<8x640xf32> -> vector<8x640xf32>
    %46 = arith.addf %41, %45 : vector<8x640xf32>
    %c3 = arith.constant 3 : index
    %c0_23 = arith.constant 0 : index
    %c0_24 = arith.constant 0 : index
    %47 = vector.load %arg4[%c3, %c0_23, %c0_24] : memref<9x8x32xbf16, #tpu.memory_space<vmem>>, vector<1x8x32xbf16>
    %48 = vector.shape_cast %47 : vector<1x8x32xbf16> to vector<8x32xbf16>
    %49 = vector.extract_strided_slice %31 {offsets = [0, 127], sizes = [32, 640], strides = [1, 1]} : vector<32x896xbf16> to vector<32x640xbf16>
    %cst_25 = arith.constant dense<0.000000e+00> : vector<8x640xf32>
    %50 = tpu.matmul %48, %49, %cst_25 {dimension_numbers = #tpu.dot_dimension_numbers<[1], [0], [0], [1], [0, 0, 1, 1], [], []>} : vector<8x32xbf16>, vector<32x640xbf16>, vector<8x640xf32> -> vector<8x640xf32>
    %51 = arith.addf %46, %50 : vector<8x640xf32>
    %c4 = arith.constant 4 : index
    %c0_26 = arith.constant 0 : index
    %c0_27 = arith.constant 0 : index
    %52 = vector.load %arg4[%c4, %c0_26, %c0_27] : memref<9x8x32xbf16, #tpu.memory_space<vmem>>, vector<1x8x32xbf16>
    %53 = vector.shape_cast %52 : vector<1x8x32xbf16> to vector<8x32xbf16>
    %54 = vector.extract_strided_slice %31 {offsets = [0, 128], sizes = [32, 640], strides = [1, 1]} : vector<32x896xbf16> to vector<32x640xbf16>
    %cst_28 = arith.constant dense<0.000000e+00> : vector<8x640xf32>
    %55 = tpu.matmul %53, %54, %cst_28 {dimension_numbers = #tpu.dot_dimension_numbers<[1], [0], [0], [1], [0, 0, 1, 1], [], []>} : vector<8x32xbf16>, vector<32x640xbf16>, vector<8x640xf32> -> vector<8x640xf32>
    %56 = arith.addf %51, %55 : vector<8x640xf32>
    %c5 = arith.constant 5 : index
    %c0_29 = arith.constant 0 : index
    %c0_30 = arith.constant 0 : index
    %57 = vector.load %arg4[%c5, %c0_29, %c0_30] : memref<9x8x32xbf16, #tpu.memory_space<vmem>>, vector<1x8x32xbf16>
    %58 = vector.shape_cast %57 : vector<1x8x32xbf16> to vector<8x32xbf16>
    %59 = vector.extract_strided_slice %31 {offsets = [0, 129], sizes = [32, 640], strides = [1, 1]} : vector<32x896xbf16> to vector<32x640xbf16>
    %cst_31 = arith.constant dense<0.000000e+00> : vector<8x640xf32>
    %60 = tpu.matmul %58, %59, %cst_31 {dimension_numbers = #tpu.dot_dimension_numbers<[1], [0], [0], [1], [0, 0, 1, 1], [], []>} : vector<8x32xbf16>, vector<32x640xbf16>, vector<8x640xf32> -> vector<8x640xf32>
    %61 = arith.addf %56, %60 : vector<8x640xf32>
    %c6 = arith.constant 6 : index
    %c0_32 = arith.constant 0 : index
    %c0_33 = arith.constant 0 : index
    %62 = vector.load %arg4[%c6, %c0_32, %c0_33] : memref<9x8x32xbf16, #tpu.memory_space<vmem>>, vector<1x8x32xbf16>
    %63 = vector.shape_cast %62 : vector<1x8x32xbf16> to vector<8x32xbf16>
    %64 = vector.extract_strided_slice %31 {offsets = [0, 145], sizes = [32, 640], strides = [1, 1]} : vector<32x896xbf16> to vector<32x640xbf16>
    %cst_34 = arith.constant dense<0.000000e+00> : vector<8x640xf32>
    %65 = tpu.matmul %63, %64, %cst_34 {dimension_numbers = #tpu.dot_dimension_numbers<[1], [0], [0], [1], [0, 0, 1, 1], [], []>} : vector<8x32xbf16>, vector<32x640xbf16>, vector<8x640xf32> -> vector<8x640xf32>
    %66 = arith.addf %61, %65 : vector<8x640xf32>
    %c7 = arith.constant 7 : index
    %c0_35 = arith.constant 0 : index
    %c0_36 = arith.constant 0 : index
    %67 = vector.load %arg4[%c7, %c0_35, %c0_36] : memref<9x8x32xbf16, #tpu.memory_space<vmem>>, vector<1x8x32xbf16>
    %68 = vector.shape_cast %67 : vector<1x8x32xbf16> to vector<8x32xbf16>
    %69 = vector.extract_strided_slice %31 {offsets = [0, 146], sizes = [32, 640], strides = [1, 1]} : vector<32x896xbf16> to vector<32x640xbf16>
    %cst_37 = arith.constant dense<0.000000e+00> : vector<8x640xf32>
    %70 = tpu.matmul %68, %69, %cst_37 {dimension_numbers = #tpu.dot_dimension_numbers<[1], [0], [0], [1], [0, 0, 1, 1], [], []>} : vector<8x32xbf16>, vector<32x640xbf16>, vector<8x640xf32> -> vector<8x640xf32>
    %71 = arith.addf %66, %70 : vector<8x640xf32>
    %c8 = arith.constant 8 : index
    %c0_38 = arith.constant 0 : index
    %c0_39 = arith.constant 0 : index
    %72 = vector.load %arg4[%c8, %c0_38, %c0_39] : memref<9x8x32xbf16, #tpu.memory_space<vmem>>, vector<1x8x32xbf16>
    %73 = vector.shape_cast %72 : vector<1x8x32xbf16> to vector<8x32xbf16>
    %74 = vector.extract_strided_slice %31 {offsets = [0, 147], sizes = [32, 640], strides = [1, 1]} : vector<32x896xbf16> to vector<32x640xbf16>
    %cst_40 = arith.constant dense<0.000000e+00> : vector<8x640xf32>
    %75 = tpu.matmul %73, %74, %cst_40 {dimension_numbers = #tpu.dot_dimension_numbers<[1], [0], [0], [1], [0, 0, 1, 1], [], []>} : vector<8x32xbf16>, vector<32x640xbf16>, vector<8x640xf32> -> vector<8x640xf32>
    %76 = arith.addf %71, %75 : vector<8x640xf32>
    %c0_41 = arith.constant 0 : index
    %c0_42 = arith.constant 0 : index
    %c0_43 = arith.constant 0 : index
    %77 = vector.load %arg7[%c0_41, %c0_42, %c0_43] : memref<1x8x640xf32, #tpu.memory_space<vmem>>, vector<1x8x640xf32>
    %78 = vector.shape_cast %77 : vector<1x8x640xf32> to vector<8x640xf32>
    %79 = vector.shape_cast %76 : vector<8x640xf32> to vector<1x8x640xf32>
    tpu.vector_store %arg7[%c0_41, %c0_42, %c0_43], %79 {strides = array<i32>} : memref<1x8x640xf32, #tpu.memory_space<vmem>>, vector<1x8x640xf32>,
    return
  }
  func.func @transform_0(%arg0: i32) -> (i32, i32, i32) {
    %c0_i32 = arith.constant 0 : i32
    %c0_i32_0 = arith.constant 0 : i32
    %c0_i32_1 = arith.constant 0 : i32
    return %arg0, %c0_i32, %c0_i32_0 : i32, i32, i32
  }
  func.func @transform_1(%arg0: i32) -> (i32, i32) {
    %c0_i32 = arith.constant 0 : i32
    %c0_i32_0 = arith.constant 0 : i32
    %c0_i32_1 = arith.constant 0 : i32
    return %c0_i32, %c0_i32_0 : i32, i32
  }
  func.func @transform_2(%arg0: i32) -> (i32, i32) {
    %c0_i32 = arith.constant 0 : i32
    %c0_i32_0 = arith.constant 0 : i32
    %c0_i32_1 = arith.constant 0 : i32
    return %c0_i32, %c0_i32_0 : i32, i32
  }
  func.func @transform_3(%arg0: i32) -> (i32, i32, i32) {
    %c0_i32 = arith.constant 0 : i32
    %c0_i32_0 = arith.constant 0 : i32
    %c0_i32_1 = arith.constant 0 : i32
    %c0_i32_2 = arith.constant 0 : i32
    return %c0_i32, %c0_i32_0, %c0_i32_1 : i32, i32, i32
  }
  func.func @transform_4(%arg0: i32) -> (i32, i32) {
    %c0_i32 = arith.constant 0 : i32
    %c0_i32_0 = arith.constant 0 : i32
    %c0_i32_1 = arith.constant 0 : i32
    return %c0_i32, %c0_i32_0 : i32, i32
  }
  func.func @transform_5(%arg0: i32) -> (i32, i32) {
    %c0_i32 = arith.constant 0 : i32
    %c0_i32_0 = arith.constant 0 : i32
    %c0_i32_1 = arith.constant 0 : i32
    return %c0_i32, %c0_i32_0 : i32, i32
  }
  func.func @transform_6(%arg0: i32) -> (i32, i32, i32) {
    %c0_i32 = arith.constant 0 : i32
    %c0_i32_0 = arith.constant 0 : i32
    %c0_i32_1 = arith.constant 0 : i32
    return %arg0, %c0_i32, %c0_i32_0 : i32, i32, i32
  }
}

</mosaic_0001>

<llo_original>
// kernel: tpu_custom_call.1
$region0: #{tpu_custom_call.1}
  #allocation0 [shape = 'u32[]', space=smem, size = 0x4, offset = 0x4, fixed_abs, tag = 'smem constant byte address 0x4 - core index']
  #allocation1 [shape = 'u32[72,128]{1,0:T(1,128)}', space=vmem, size = 0x9000, scoped, tag = 'internal scratch']
  %s0 = inlined_call_operand.hbm [shape: f32[1,8,768], index: 0, kind: input, shape index: {}]
  %s1 = inlined_call_operand.hbm [shape: bf16[40,72], index: 1, kind: input, shape index: {}]
  %s2 = inlined_call_operand.vmem [shape: f32[32,1], index: 2, kind: input, shape index: {}]
  %s3 = inlined_call_operand.vmem [shape: bf16[9,8,32], index: 3, kind: input, shape index: {}]
  %s4 = inlined_call_operand.vmem [shape: f32[8,1], index: 4, kind: input, shape index: {}]
  %s5 = inlined_call_operand.vmem [shape: f32[1,640], index: 5, kind: input, shape index: {}]
  %s6 = inlined_call_operand.hbm [shape: f32[1,8,640], index: 6, kind: output, shape index: {}]
  %s7 = sld [smem:[#allocation0]]
  $region42: #{tpu_custom_call.1} parent=0
    _
  %s9 = ssub.s32 1, %s7
  %s10 = scalar_select 0, %s9, %s7
  $region1: #{tpu_custom_call.1} parent=0
    #allocation2 [shape = 'u8[24576]{0}', space=vmem, size = 0x6000, scoped, tag = 'input window, operand 0, single buffered']
    #allocation3 [shape = 's32[1]{0}', space=sflag, size = 0x4, scoped, tag = 'scoped memory for tpu_custom_call.1']
    #allocation4 [shape = 's32[1]{0}', space=sflag, size = 0x4, scoped, tag = 'scoped memory for tpu_custom_call.1']
    #allocation5 [shape = 'u8[10240]{0}', space=vmem, size = 0x2800, scoped, tag = 'input window, operand 1, single buffered']
    #allocation6 [shape = 's32[1]{0}', space=sflag, size = 0x4, scoped, tag = 'scoped memory for tpu_custom_call.1']
    #allocation7 [shape = 'u8[20480]{0}', space=vmem, size = 0x5000, scoped, tag = 'output window, operand 0, single buffered']
    %11 = vsyncpa [#allocation3], 0
    %12 = vsyncpa [#allocation6], 0
    %13 = vsyncpa [#allocation4], 0
    // Predicated region
    $region2: #{tpu_custom_call.1} parent=1 // pred_check
      _
    $region3: #{tpu_custom_call.1} parent=1 // pred_check_branch
      %15 = sbr.rel (0) target = $region5
    $region4: #{tpu_custom_call.1} parent=1 // pred_region
      %17 = vsyncadd [#allocation3], 0
      %s19 = sshll.u32 %s0, 4
      %s20 = int_to_ptr.hbm [resolvable:$true] %s19
      %s21 = sshll.u32 [#allocation2], 4
      %s22 = int_to_ptr.vmem [resolvable:$true] %s21
      %24 = dma.hbm_to_vmem [thread:$0]  %s20, 768, %s22, [#allocation3]
    $region5: #{tpu_custom_call.1} parent=1 // pred_fallthru
      _
    // Predicated region
    $region6: #{tpu_custom_call.1} parent=1 // pred_check
      _
    $region7: #{tpu_custom_call.1} parent=1 // pred_check_branch
      %26 = sbr.rel (0) target = $region9
    $region8: #{tpu_custom_call.1} parent=1 // pred_region
      %28 = vsyncadd [#allocation6], 0
      %s29 = sshll.u32 %s1, 4
      %s30 = int_to_ptr.hbm [resolvable:$true] %s29
      %s31 = sshll.u32 [#allocation5], 4
      %s32 = int_to_ptr.vmem [resolvable:$true] %s31
      %37 = dma.hbm_to_vmem [thread:$0]  %s30, 320, %s32, [#allocation6], 64, 64, 4
    $region9: #{tpu_custom_call.1} parent=1 // pred_fallthru
      _
    // Predicated region
    $region10: #{tpu_custom_call.1} parent=1 // pred_check
      _
    $region11: #{tpu_custom_call.1} parent=1 // pred_check_branch
      %39 = sbr.rel (0) target = $region13
    $region12: #{tpu_custom_call.1} parent=1 // pred_region
      _
    $region13: #{tpu_custom_call.1} parent=1 // pred_fallthru
      _
    // Predicated region
    $region14: #{tpu_custom_call.1} parent=1 // pred_check
      _
    $region15: #{tpu_custom_call.1} parent=1 // pred_check_branch
      %41 = sbr.rel (0) target = $region17
    $region16: #{tpu_custom_call.1} parent=1 // pred_region
      _
    $region17: #{tpu_custom_call.1} parent=1 // pred_fallthru
      _
    // Predicated region
    $region18: #{tpu_custom_call.1} parent=1 // pred_check
      _
    $region19: #{tpu_custom_call.1} parent=1 // pred_check_branch
      %43 = sbr.rel (0) target = $region21
    $region20: #{tpu_custom_call.1} parent=1 // pred_region
      _
    $region21: #{tpu_custom_call.1} parent=1 // pred_fallthru
      _
    // Predicated region
    $region22: #{tpu_custom_call.1} parent=1 // pred_check
      _
    $region23: #{tpu_custom_call.1} parent=1 // pred_check_branch
      %45 = sbr.rel (0) target = $region25
    $region24: #{tpu_custom_call.1} parent=1 // pred_region
      _
    $region25: #{tpu_custom_call.1} parent=1 // pred_fallthru
      _
    // Predicated region
    $region26: #{tpu_custom_call.1} parent=1 // pred_check
      _
    $region27: #{tpu_custom_call.1} parent=1 // pred_check_branch
      %47 = sbr.rel (0) target = $region29
    $region28: #{tpu_custom_call.1} parent=1 // pred_region
      %49 = dma.done [#allocation3], 768
    $region29: #{tpu_custom_call.1} parent=1 // pred_fallthru
      _
    // Predicated region
    $region30: #{tpu_custom_call.1} parent=1 // pred_check
      _
    $region31: #{tpu_custom_call.1} parent=1 // pred_check_branch
      %51 = sbr.rel (0) target = $region33
    $region32: #{tpu_custom_call.1} parent=1 // pred_region
      %53 = dma.done [#allocation6], 320
    $region33: #{tpu_custom_call.1} parent=1 // pred_fallthru
      _
    %v55 = vld [vmem:[#allocation2] sm:$0xff]
    %v56 = vld [vmem:[#allocation2 + $0x8] sm:$0xff]
    %v57 = vld [vmem:[#allocation2 + $0x10] sm:$0xff]
    %v58 = vld [vmem:[#allocation2 + $0x18] sm:$0xff]
    %v59 = vld [vmem:[#allocation2 + $0x20] sm:$0xff]
    %v60 = vld [vmem:[#allocation2 + $0x28] sm:$0xff]
    %67 = vrot.lane.b32.xlu0 %v55, 127
    %v68 = vpop.permute.xlu0 %67
    %69 = vrot.lane.b32.xlu0 %v56, 127
    %v70 = vpop.permute.xlu0 %69
    %71 = vrot.lane.b32.xlu0 %v57, 127
    %v72 = vpop.permute.xlu0 %71
    %73 = vrot.lane.b32.xlu0 %v58, 127
    %v74 = vpop.permute.xlu0 %73
    %75 = vrot.lane.b32.xlu0 %v59, 127
    %v76 = vpop.permute.xlu0 %75
    %77 = vrot.lane.b32.xlu0 %v60, 127
    %v78 = vpop.permute.xlu0 %77
    %vm79 = vcmask 1039360
    %v80 = vsel %vm79, %v68, %v70
    %v81 = vsel %vm79, %v70, %v72
    %v82 = vsel %vm79, %v72, %v74
    %v83 = vsel %vm79, %v74, %v76
    %v84 = vsel %vm79, %v76, %v78
    %90 = vrot.lane.b32.xlu0 %v55, 126
    %v91 = vpop.permute.xlu0 %90
    %92 = vrot.lane.b32.xlu0 %v56, 126
    %v93 = vpop.permute.xlu0 %92
    %94 = vrot.lane.b32.xlu0 %v57, 126
    %v95 = vpop.permute.xlu0 %94
    %96 = vrot.lane.b32.xlu0 %v58, 126
    %v97 = vpop.permute.xlu0 %96
    %98 = vrot.lane.b32.xlu0 %v59, 126
    %v99 = vpop.permute.xlu0 %98
    %100 = vrot.lane.b32.xlu0 %v60, 126
    %v101 = vpop.permute.xlu0 %100
    %vm102 = vcmask 1031168
    %v103 = vsel %vm102, %v91, %v93
    %v104 = vsel %vm102, %v93, %v95
    %v105 = vsel %vm102, %v95, %v97
    %v106 = vsel %vm102, %v97, %v99
    %v107 = vsel %vm102, %v99, %v101
    %113 = vrot.lane.b32.xlu0 %v55, 110
    %v114 = vpop.permute.xlu0 %113
    %115 = vrot.lane.b32.xlu0 %v56, 110
    %v116 = vpop.permute.xlu0 %115
    %117 = vrot.lane.b32.xlu0 %v57, 110
    %v118 = vpop.permute.xlu0 %117
    %119 = vrot.lane.b32.xlu0 %v58, 110
    %v120 = vpop.permute.xlu0 %119
    %121 = vrot.lane.b32.xlu0 %v59, 110
    %v122 = vpop.permute.xlu0 %121
    %123 = vrot.lane.b32.xlu0 %v60, 110
    %v124 = vpop.permute.xlu0 %123
    %vm125 = vcmask 900096
    %v126 = vsel %vm125, %v114, %v116
    %v127 = vsel %vm125, %v116, %v118
    %v128 = vsel %vm125, %v118, %v120
    %v129 = vsel %vm125, %v120, %v122
    %v130 = vsel %vm125, %v122, %v124
    %136 = vrot.lane.b32.xlu0 %v55, 109
    %v137 = vpop.permute.xlu0 %136
    %138 = vrot.lane.b32.xlu0 %v56, 109
    %v139 = vpop.permute.xlu0 %138
    %140 = vrot.lane.b32.xlu0 %v57, 109
    %v141 = vpop.permute.xlu0 %140
    %142 = vrot.lane.b32.xlu0 %v58, 109
    %v143 = vpop.permute.xlu0 %142
    %144 = vrot.lane.b32.xlu0 %v59, 109
    %v145 = vpop.permute.xlu0 %144
    %146 = vrot.lane.b32.xlu0 %v60, 109
    %v147 = vpop.permute.xlu0 %146
    %vm148 = vcmask 891904
    %v149 = vsel %vm148, %v137, %v139
    %v150 = vsel %vm148, %v139, %v141
    %v151 = vsel %vm148, %v141, %v143
    %v152 = vsel %vm148, %v143, %v145
    %v153 = vsel %vm148, %v145, %v147
    %159 = vrot.lane.b32.xlu0 %v55, 108
    %v160 = vpop.permute.xlu0 %159
    %161 = vrot.lane.b32.xlu0 %v56, 108
    %v162 = vpop.permute.xlu0 %161
    %163 = vrot.lane.b32.xlu0 %v57, 108
    %v164 = vpop.permute.xlu0 %163
    %165 = vrot.lane.b32.xlu0 %v58, 108
    %v166 = vpop.permute.xlu0 %165
    %167 = vrot.lane.b32.xlu0 %v59, 108
    %v168 = vpop.permute.xlu0 %167
    %169 = vrot.lane.b32.xlu0 %v60, 108
    %v170 = vpop.permute.xlu0 %169
    %vm171 = vcmask 883712
    %v172 = vsel %vm171, %v160, %v162
    %v173 = vsel %vm171, %v162, %v164
    %v174 = vsel %vm171, %v164, %v166
    %v175 = vsel %vm171, %v166, %v168
    %v176 = vsel %vm171, %v168, %v170
    %182 = vrot.lane.b32.xlu0 %v55, 92
    %v183 = vpop.permute.xlu0 %182
    %184 = vrot.lane.b32.xlu0 %v56, 92
    %v185 = vpop.permute.xlu0 %184
    %186 = vrot.lane.b32.xlu0 %v57, 92
    %v187 = vpop.permute.xlu0 %186
    %188 = vrot.lane.b32.xlu0 %v58, 92
    %v189 = vpop.permute.xlu0 %188
    %190 = vrot.lane.b32.xlu0 %v59, 92
    %v191 = vpop.permute.xlu0 %190
    %192 = vrot.lane.b32.xlu0 %v60, 92
    %v193 = vpop.permute.xlu0 %192
    %vm194 = vcmask 752640
    %v195 = vsel %vm194, %v183, %v185
    %v196 = vsel %vm194, %v185, %v187
    %v197 = vsel %vm194, %v187, %v189
    %v198 = vsel %vm194, %v189, %v191
    %v199 = vsel %vm194, %v191, %v193
    %205 = vrot.lane.b32.xlu0 %v55, 91
    %v206 = vpop.permute.xlu0 %205
    %207 = vrot.lane.b32.xlu0 %v56, 91
    %v208 = vpop.permute.xlu0 %207
    %209 = vrot.lane.b32.xlu0 %v57, 91
    %v210 = vpop.permute.xlu0 %209
    %211 = vrot.lane.b32.xlu0 %v58, 91
    %v212 = vpop.permute.xlu0 %211
    %213 = vrot.lane.b32.xlu0 %v59, 91
    %v214 = vpop.permute.xlu0 %213
    %215 = vrot.lane.b32.xlu0 %v60, 91
    %v216 = vpop.permute.xlu0 %215
    %vm217 = vcmask 744448
    %v218 = vsel %vm217, %v206, %v208
    %v219 = vsel %vm217, %v208, %v210
    %v220 = vsel %vm217, %v210, %v212
    %v221 = vsel %vm217, %v212, %v214
    %v222 = vsel %vm217, %v214, %v216
    %228 = vrot.lane.b32.xlu0 %v55, 90
    %v229 = vpop.permute.xlu0 %228
    %230 = vrot.lane.b32.xlu0 %v56, 90
    %v231 = vpop.permute.xlu0 %230
    %232 = vrot.lane.b32.xlu0 %v57, 90
    %v233 = vpop.permute.xlu0 %232
    %234 = vrot.lane.b32.xlu0 %v58, 90
    %v235 = vpop.permute.xlu0 %234
    %236 = vrot.lane.b32.xlu0 %v59, 90
    %v237 = vpop.permute.xlu0 %236
    %238 = vrot.lane.b32.xlu0 %v60, 90
    %v239 = vpop.permute.xlu0 %238
    %vm240 = vcmask 736256
    %v241 = vsel %vm240, %v229, %v231
    %v242 = vsel %vm240, %v231, %v233
    %v243 = vsel %vm240, %v233, %v235
    %v244 = vsel %vm240, %v235, %v237
    %v245 = vsel %vm240, %v237, %v239
    %v251 = vpack.c.bf16 %v80, %v55
    %v252 = vpack.c.bf16 %v81, %v56
    %v253 = vpack.c.bf16 %v82, %v57
    %v254 = vpack.c.bf16 %v83, %v58
    %v255 = vpack.c.bf16 %v84, %v59
    %v256 = vpack.c.bf16 %v126, %v103
    %v257 = vpack.c.bf16 %v127, %v104
    %v258 = vpack.c.bf16 %v128, %v105
    %v259 = vpack.c.bf16 %v129, %v106
    %v260 = vpack.c.bf16 %v130, %v107
    %v261 = vpack.c.bf16 %v172, %v149
    %v262 = vpack.c.bf16 %v173, %v150
    %v263 = vpack.c.bf16 %v174, %v151
    %v264 = vpack.c.bf16 %v175, %v152
    %v265 = vpack.c.bf16 %v176, %v153
    %v266 = vpack.c.bf16 %v218, %v195
    %v267 = vpack.c.bf16 %v219, %v196
    %v268 = vpack.c.bf16 %v220, %v197
    %v269 = vpack.c.bf16 %v221, %v198
    %v270 = vpack.c.bf16 %v222, %v199
    %v271 = vpack.c.bf16 %v241, %v241
    %v272 = vpack.c.bf16 %v242, %v242
    %v273 = vpack.c.bf16 %v243, %v243
    %v274 = vpack.c.bf16 %v244, %v244
    %v275 = vpack.c.bf16 %v245, %v245
    %v276 = vld [vmem:[#allocation5] sm:$0xf]
    %v277 = vld [vmem:[#allocation5 + $0x4] sm:$0xf]
    %v278 = vld [vmem:[#allocation5 + $0x8] sm:$0xf]
    %v279 = vld [vmem:[#allocation5 + $0xc] sm:$0xf]
    %v280 = vld [vmem:[#allocation5 + $0x10] sm:$0xf]
    %v286 = vunpack.c.l.b16 %v276
    %v287 = vunpack.c.l.b16 %v277
    %v288 = vunpack.c.l.b16 %v278
    %v289 = vunpack.c.l.b16 %v279
    %v290 = vunpack.c.l.b16 %v280
    %v291 = vpack.c.b16 %v287, %v286
    %v292 = vpack.c.b16 %v289, %v288
    %v293 = vpack.c.b16 %v290, %v290
    %vm294 = vcmask 588800
    %v296 = vsel %vm294, %v291, 0
    %v299 = vsel %vm294, %v292, 0
    %v302 = vsel %vm294, %v293, 0
    %vm304 = vcmask 1043456
    %v306 = vsel %vm304, %v271, 0
    %v309 = vsel %vm304, %v272, 0
    %v312 = vsel %vm304, %v273, 0
    %v315 = vsel %vm304, %v274, 0
    %v318 = vsel %vm304, %v275, 0
    %320 = vmatpush.bf16.msra.mxu0 0
    %321 = vmatpush.bf16.msra.mxu0 0
    %322 = vmatpush.bf16.msra.mxu0 0
    %323 = vmatpush.bf16.msra.mxu0 %v306
    %324 = vmatpush.bf16.msra.mxu0 %v266
    %325 = vmatpush.bf16.msra.mxu0 %v261
    %326 = vmatpush.bf16.msra.mxu0 %v256
    %327 = vmatpush.bf16.msra.mxu0 %v251
    %328 = vmatmul.bf16.gmra.mxu0 %v296
    %v329 = vpop.f32.mrf.mxu0
    %v330 = vadd.f32 0.0, %v329
    %v331 = vpop.f32.mrf.mxu0
    %v332 = vadd.f32 0.0, %v331
    %333 = vmatmul.bf16.gmra.mxu0 %v299
    %v334 = vpop.f32.mrf.mxu0
    %v335 = vadd.f32 0.0, %v334
    %v336 = vpop.f32.mrf.mxu0
    %v337 = vadd.f32 0.0, %v336
    %338 = vmatmul.bf16.gmra.mxu0 %v302
    %v339 = vpop.f32.mrf.mxu0
    %v340 = vadd.f32 0.0, %v339
    %v341 = vpop.f32.mrf.mxu0
    %342 = vdwg.mxu0
    %343 = vmatpush.bf16.msra.mxu0 0
    %344 = vmatpush.bf16.msra.mxu0 0
    %345 = vmatpush.bf16.msra.mxu0 0
    %346 = vmatpush.bf16.msra.mxu0 %v309
    %347 = vmatpush.bf16.msra.mxu0 %v267
    %348 = vmatpush.bf16.msra.mxu0 %v262
    %349 = vmatpush.bf16.msra.mxu0 %v257
    %350 = vmatpush.bf16.msra.mxu0 %v252
    %351 = vmatmul.bf16.gmra.mxu0 %v296
    %v352 = vpop.f32.mrf.mxu0
    %v353 = vadd.f32 0.0, %v352
    %v354 = vpop.f32.mrf.mxu0
    %v355 = vadd.f32 0.0, %v354
    %356 = vmatmul.bf16.gmra.mxu0 %v299
    %v357 = vpop.f32.mrf.mxu0
    %v358 = vadd.f32 0.0, %v357
    %v359 = vpop.f32.mrf.mxu0
    %v360 = vadd.f32 0.0, %v359
    %361 = vmatmul.bf16.gmra.mxu0 %v302
    %v362 = vpop.f32.mrf.mxu0
    %v363 = vadd.f32 0.0, %v362
    %v364 = vpop.f32.mrf.mxu0
    %365 = vdwg.mxu0
    %366 = vmatpush.bf16.msra.mxu0 0
    %367 = vmatpush.bf16.msra.mxu0 0
    %368 = vmatpush.bf16.msra.mxu0 0
    %369 = vmatpush.bf16.msra.mxu0 %v312
    %370 = vmatpush.bf16.msra.mxu0 %v268
    %371 = vmatpush.bf16.msra.mxu0 %v263
    %372 = vmatpush.bf16.msra.mxu0 %v258
    %373 = vmatpush.bf16.msra.mxu0 %v253
    %374 = vmatmul.bf16.gmra.mxu0 %v296
    %v375 = vpop.f32.mrf.mxu0
    %v376 = vadd.f32 0.0, %v375
    %v377 = vpop.f32.mrf.mxu0
    %v378 = vadd.f32 0.0, %v377
    %379 = vmatmul.bf16.gmra.mxu0 %v299
    %v380 = vpop.f32.mrf.mxu0
    %v381 = vadd.f32 0.0, %v380
    %v382 = vpop.f32.mrf.mxu0
    %v383 = vadd.f32 0.0, %v382
    %384 = vmatmul.bf16.gmra.mxu0 %v302
    %v385 = vpop.f32.mrf.mxu0
    %v386 = vadd.f32 0.0, %v385
    %v387 = vpop.f32.mrf.mxu0
    %388 = vdwg.mxu0
    %389 = vmatpush.bf16.msra.mxu0 0
    %390 = vmatpush.bf16.msra.mxu0 0
    %391 = vmatpush.bf16.msra.mxu0 0
    %392 = vmatpush.bf16.msra.mxu0 %v315
    %393 = vmatpush.bf16.msra.mxu0 %v269
    %394 = vmatpush.bf16.msra.mxu0 %v264
    %395 = vmatpush.bf16.msra.mxu0 %v259
    %396 = vmatpush.bf16.msra.mxu0 %v254
    %397 = vmatmul.bf16.gmra.mxu0 %v296
    %v398 = vpop.f32.mrf.mxu0
    %v399 = vadd.f32 0.0, %v398
    %v400 = vpop.f32.mrf.mxu0
    %v401 = vadd.f32 0.0, %v400
    %402 = vmatmul.bf16.gmra.mxu0 %v299
    %v403 = vpop.f32.mrf.mxu0
    %v404 = vadd.f32 0.0, %v403
    %v405 = vpop.f32.mrf.mxu0
    %v406 = vadd.f32 0.0, %v405
    %407 = vmatmul.bf16.gmra.mxu0 %v302
    %v408 = vpop.f32.mrf.mxu0
    %v409 = vadd.f32 0.0, %v408
    %v410 = vpop.f32.mrf.mxu0
    %411 = vdwg.mxu0
    %412 = vmatpush.bf16.msra.mxu0 0
    %413 = vmatpush.bf16.msra.mxu0 0
    %414 = vmatpush.bf16.msra.mxu0 0
    %415 = vmatpush.bf16.msra.mxu0 %v318
    %416 = vmatpush.bf16.msra.mxu0 %v270
    %417 = vmatpush.bf16.msra.mxu0 %v265
    %418 = vmatpush.bf16.msra.mxu0 %v260
    %419 = vmatpush.bf16.msra.mxu0 %v255
    %420 = vmatmul.bf16.gmra.mxu0 %v296
    %v421 = vpop.f32.mrf.mxu0
    %v422 = vadd.f32 0.0, %v421
    %v423 = vpop.f32.mrf.mxu0
    %v424 = vadd.f32 0.0, %v423
    %425 = vmatmul.bf16.gmra.mxu0 %v299
    %v426 = vpop.f32.mrf.mxu0
    %v427 = vadd.f32 0.0, %v426
    %v428 = vpop.f32.mrf.mxu0
    %v429 = vadd.f32 0.0, %v428
    %430 = vmatmul.bf16.gmra.mxu0 %v302
    %v431 = vpop.f32.mrf.mxu0
    %v432 = vadd.f32 0.0, %v431
    %v433 = vpop.f32.mrf.mxu0
    %434 = vdwg.mxu0
    %v435 = vld [vmem:[%s4] sm:$0xff]
    %437 = vset.pattern.permute.xlu0 0
    %438 = vperm.xlu0 %437, %v435
    %v439 = vpop.permute.xlu0 %438
    %v441 = vadd.f32 %v340, %v439
    %v442 = vadd.f32 %v363, %v439
    %v443 = vadd.f32 %v386, %v439
    %v444 = vadd.f32 %v409, %v439
    %v445 = vadd.f32 %v432, %v439
    %v446 = vld [vmem:[%s2] sm:$0xff]
    %v447 = vld [vmem:[%s2 + $0x8] sm:$0xff]
    %v448 = vld [vmem:[%s2 + $0x10] sm:$0xff]
    %v449 = vld [vmem:[%s2 + $0x18] sm:$0xff]
    %451 = vset.pattern.permute.xlu0 0
    %452 = vperm.xlu0 %451, %v446
    %v453 = vpop.permute.xlu0 %452
    %456 = vset.pattern.permute.xlu0 0
    %457 = vperm.xlu0 %456, %v447
    %v458 = vpop.permute.xlu0 %457
    %461 = vset.pattern.permute.xlu0 0
    %462 = vperm.xlu0 %461, %v448
    %v463 = vpop.permute.xlu0 %462
    %466 = vset.pattern.permute.xlu0 0
    %467 = vperm.xlu0 %466, %v449
    %v468 = vpop.permute.xlu0 %467
    %v470 = vadd.f32 %v330, %v453
    %v471 = vadd.f32 %v353, %v453
    %v472 = vadd.f32 %v376, %v453
    %v473 = vadd.f32 %v399, %v453
    %v474 = vadd.f32 %v422, %v453
    %v475 = vadd.f32 %v332, %v458
    %v476 = vadd.f32 %v355, %v458
    %v477 = vadd.f32 %v378, %v458
    %v478 = vadd.f32 %v401, %v458
    %v479 = vadd.f32 %v424, %v458
    %v480 = vadd.f32 %v335, %v463
    %v481 = vadd.f32 %v358, %v463
    %v482 = vadd.f32 %v381, %v463
    %v483 = vadd.f32 %v404, %v463
    %v484 = vadd.f32 %v427, %v463
    %v485 = vadd.f32 %v337, %v468
    %v486 = vadd.f32 %v360, %v468
    %v487 = vadd.f32 %v383, %v468
    %v488 = vadd.f32 %v406, %v468
    %v489 = vadd.f32 %v429, %v468
    %v490 = vmax.f32 %v470, 0.0
    %v491 = vmax.f32 %v471, 0.0
    %v492 = vmax.f32 %v472, 0.0
    %v493 = vmax.f32 %v473, 0.0
    %v494 = vmax.f32 %v474, 0.0
    %v495 = vmax.f32 %v475, 0.0
    %v496 = vmax.f32 %v476, 0.0
    %v497 = vmax.f32 %v477, 0.0
    %v498 = vmax.f32 %v478, 0.0
    %v499 = vmax.f32 %v479, 0.0
    %v500 = vmax.f32 %v480, 0.0
    %v501 = vmax.f32 %v481, 0.0
    %v502 = vmax.f32 %v482, 0.0
    %v503 = vmax.f32 %v483, 0.0
    %v504 = vmax.f32 %v484, 0.0
    %v505 = vmax.f32 %v485, 0.0
    %v506 = vmax.f32 %v486, 0.0
    %v507 = vmax.f32 %v487, 0.0
    %v508 = vmax.f32 %v488, 0.0
    %v509 = vmax.f32 %v489, 0.0
    %v510 = vld [vmem:[%s5] sm:$0x1f]
    %v512 = vperm.slane %v510, 0
    %v513 = vperm.slane %v510, 1
    %v514 = vperm.slane %v510, 2
    %v515 = vperm.slane %v510, 3
    %v516 = vperm.slane %v510, 4
    %v522 = vmul.f32 %v490, %v512
    %v523 = vmul.f32 %v491, %v513
    %v524 = vmul.f32 %v492, %v514
    %v525 = vmul.f32 %v493, %v515
    %v526 = vmul.f32 %v494, %v516
    %v527 = vmul.f32 %v495, %v512
    %v528 = vmul.f32 %v496, %v513
    %v529 = vmul.f32 %v497, %v514
    %v530 = vmul.f32 %v498, %v515
    %v531 = vmul.f32 %v499, %v516
    %v532 = vmul.f32 %v500, %v512
    %v533 = vmul.f32 %v501, %v513
    %v534 = vmul.f32 %v502, %v514
    %v535 = vmul.f32 %v503, %v515
    %v536 = vmul.f32 %v504, %v516
    %v537 = vmul.f32 %v505, %v512
    %v538 = vmul.f32 %v506, %v513
    %v539 = vmul.f32 %v507, %v514
    %v540 = vmul.f32 %v508, %v515
    %v541 = vmul.f32 %v509, %v516
    %v542 = vpack.c.bf16 %v523, %v522
    %v543 = vpack.c.bf16 %v525, %v524
    %v544 = vpack.c.bf16 %v526, %v526
    %v545 = vpack.c.bf16 %v528, %v527
    %v546 = vpack.c.bf16 %v530, %v529
    %v547 = vpack.c.bf16 %v531, %v531
    %v548 = vpack.c.bf16 %v533, %v532
    %v549 = vpack.c.bf16 %v535, %v534
    %v550 = vpack.c.bf16 %v536, %v536
    %v551 = vpack.c.bf16 %v538, %v537
    %v552 = vpack.c.bf16 %v540, %v539
    %v553 = vpack.c.bf16 %v541, %v541
    %v566 = vunpack.c.l.b16 %v542
    %v567 = vunpack.c.h.b16 %v542
    %v568 = vunpack.c.l.b16 %v543
    %v569 = vunpack.c.h.b16 %v543
    %v570 = vunpack.c.l.b16 %v544
    %v571 = vunpack.c.l.b16 %v545
    %v572 = vunpack.c.h.b16 %v545
    %v573 = vunpack.c.l.b16 %v546
    %v574 = vunpack.c.h.b16 %v546
    %v575 = vunpack.c.l.b16 %v547
    %v576 = vunpack.c.l.b16 %v548
    %v577 = vunpack.c.h.b16 %v548
    %v578 = vunpack.c.l.b16 %v549
    %v579 = vunpack.c.h.b16 %v549
    %v580 = vunpack.c.l.b16 %v550
    %v581 = vunpack.c.l.b16 %v551
    %v582 = vunpack.c.h.b16 %v551
    %v583 = vunpack.c.l.b16 %v552
    %v584 = vunpack.c.h.b16 %v552
    %v585 = vunpack.c.l.b16 %v553
    %v586 = vpack.c.b16 %v571, %v566
    %v587 = vpack.c.b16 %v572, %v567
    %v588 = vpack.c.b16 %v573, %v568
    %v589 = vpack.c.b16 %v574, %v569
    %v590 = vpack.c.b16 %v575, %v570
    %v591 = vpack.c.b16 %v581, %v576
    %v592 = vpack.c.b16 %v582, %v577
    %v593 = vpack.c.b16 %v583, %v578
    %v594 = vpack.c.b16 %v584, %v579
    %v595 = vpack.c.b16 %v585, %v580
    %v606 = vld [vmem:[%s3] sm:$0xf]
    %608 = vrot.lane.b32.xlu0 0, 19
    %v609 = vpop.permute.xlu0 %608
    %610 = vrot.lane.b32.xlu0 %v586, 19
    %v611 = vpop.permute.xlu0 %610
    %612 = vrot.lane.b32.xlu0 %v587, 19
    %v613 = vpop.permute.xlu0 %612
    %614 = vrot.lane.b32.xlu0 %v588, 19
    %v615 = vpop.permute.xlu0 %614
    %616 = vrot.lane.b32.xlu0 %v589, 19
    %v617 = vpop.permute.xlu0 %616
    %618 = vrot.lane.b32.xlu0 %v590, 19
    %v619 = vpop.permute.xlu0 %618
    %620 = vrot.lane.b32.xlu0 %v591, 19
    %v621 = vpop.permute.xlu0 %620
    %622 = vrot.lane.b32.xlu0 %v592, 19
    %v623 = vpop.permute.xlu0 %622
    %624 = vrot.lane.b32.xlu0 %v593, 19
    %v625 = vpop.permute.xlu0 %624
    %626 = vrot.lane.b32.xlu0 %v594, 19
    %v627 = vpop.permute.xlu0 %626
    %628 = vrot.lane.b32.xlu0 %v595, 19
    %v629 = vpop.permute.xlu0 %628
    %vm630 = vcmask 154624
    %v631 = vsel %vm630, %v609, %v611
    %v632 = vsel %vm630, %v611, %v613
    %v633 = vsel %vm630, %v613, %v615
    %v634 = vsel %vm630, %v615, %v617
    %v635 = vsel %vm630, %v617, %v619
    %v636 = vsel %vm630, %v609, %v621
    %v637 = vsel %vm630, %v621, %v623
    %v638 = vsel %vm630, %v623, %v625
    %v639 = vsel %vm630, %v625, %v627
    %v640 = vsel %vm630, %v627, %v629
    %vm651 = vcmask 261120
    %v653 = vsel %vm651, %v606, 0
    %655 = vmatpush.bf16.msra.mxu0 0
    %656 = vmatpush.bf16.msra.mxu0 0
    %657 = vmatpush.bf16.msra.mxu0 0
    %658 = vmatpush.bf16.msra.mxu0 0
    %659 = vmatpush.bf16.msra.mxu0 0
    %660 = vmatpush.bf16.msra.mxu0 0
    %661 = vmatpush.bf16.msra.mxu0 %v636
    %662 = vmatpush.bf16.msra.mxu0 %v631
    %663 = vmatmul.bf16.gmra.mxu0 %v653
    %v664 = vpop.f32.mrf.mxu0
    %v665 = vadd.f32 0.0, %v664
    %v666 = vpop.f32.mrf.mxu0
    %667 = vdwg.mxu0
    %668 = vmatpush.bf16.msra.mxu0 0
    %669 = vmatpush.bf16.msra.mxu0 0
    %670 = vmatpush.bf16.msra.mxu0 0
    %671 = vmatpush.bf16.msra.mxu0 0
    %672 = vmatpush.bf16.msra.mxu0 0
    %673 = vmatpush.bf16.msra.mxu0 0
    %674 = vmatpush.bf16.msra.mxu0 %v637
    %675 = vmatpush.bf16.msra.mxu0 %v632
    %676 = vmatmul.bf16.gmra.mxu0 %v653
    %v677 = vpop.f32.mrf.mxu0
    %v678 = vadd.f32 0.0, %v677
    %v679 = vpop.f32.mrf.mxu0
    %680 = vdwg.mxu0
    %681 = vmatpush.bf16.msra.mxu0 0
    %682 = vmatpush.bf16.msra.mxu0 0
    %683 = vmatpush.bf16.msra.mxu0 0
    %684 = vmatpush.bf16.msra.mxu0 0
    %685 = vmatpush.bf16.msra.mxu0 0
    %686 = vmatpush.bf16.msra.mxu0 0
    %687 = vmatpush.bf16.msra.mxu0 %v638
    %688 = vmatpush.bf16.msra.mxu0 %v633
    %689 = vmatmul.bf16.gmra.mxu0 %v653
    %v690 = vpop.f32.mrf.mxu0
    %v691 = vadd.f32 0.0, %v690
    %v692 = vpop.f32.mrf.mxu0
    %693 = vdwg.mxu0
    %694 = vmatpush.bf16.msra.mxu0 0
    %695 = vmatpush.bf16.msra.mxu0 0
    %696 = vmatpush.bf16.msra.mxu0 0
    %697 = vmatpush.bf16.msra.mxu0 0
    %698 = vmatpush.bf16.msra.mxu0 0
    %699 = vmatpush.bf16.msra.mxu0 0
    %700 = vmatpush.bf16.msra.mxu0 %v639
    %701 = vmatpush.bf16.msra.mxu0 %v634
    %702 = vmatmul.bf16.gmra.mxu0 %v653
    %v703 = vpop.f32.mrf.mxu0
    %v704 = vadd.f32 0.0, %v703
    %v705 = vpop.f32.mrf.mxu0
    %706 = vdwg.mxu0
    %707 = vmatpush.bf16.msra.mxu0 0
    %708 = vmatpush.bf16.msra.mxu0 0
    %709 = vmatpush.bf16.msra.mxu0 0
    %710 = vmatpush.bf16.msra.mxu0 0
    %711 = vmatpush.bf16.msra.mxu0 0
    %712 = vmatpush.bf16.msra.mxu0 0
    %713 = vmatpush.bf16.msra.mxu0 %v640
    %714 = vmatpush.bf16.msra.mxu0 %v635
    %715 = vmatmul.bf16.gmra.mxu0 %v653
    %v716 = vpop.f32.mrf.mxu0
    %v717 = vadd.f32 0.0, %v716
    %v718 = vpop.f32.mrf.mxu0
    %719 = vdwg.mxu0
    %v720 = vadd.f32 %v441, %v665
    %v721 = vadd.f32 %v442, %v678
    %v722 = vadd.f32 %v443, %v691
    %v723 = vadd.f32 %v444, %v704
    %v724 = vadd.f32 %v445, %v717
    %s725 = scalar_lea.vmem %s3, 4
    %v726 = vld [vmem:[%s725] sm:$0xf]
    %727 = vrot.lane.b32.xlu0 0, 18
    %v728 = vpop.permute.xlu0 %727
    %729 = vrot.lane.b32.xlu0 %v586, 18
    %v730 = vpop.permute.xlu0 %729
    %731 = vrot.lane.b32.xlu0 %v587, 18
    %v732 = vpop.permute.xlu0 %731
    %733 = vrot.lane.b32.xlu0 %v588, 18
    %v734 = vpop.permute.xlu0 %733
    %735 = vrot.lane.b32.xlu0 %v589, 18
    %v736 = vpop.permute.xlu0 %735
    %737 = vrot.lane.b32.xlu0 %v590, 18
    %v738 = vpop.permute.xlu0 %737
    %739 = vrot.lane.b32.xlu0 %v591, 18
    %v740 = vpop.permute.xlu0 %739
    %741 = vrot.lane.b32.xlu0 %v592, 18
    %v742 = vpop.permute.xlu0 %741
    %743 = vrot.lane.b32.xlu0 %v593, 18
    %v744 = vpop.permute.xlu0 %743
    %745 = vrot.lane.b32.xlu0 %v594, 18
    %v746 = vpop.permute.xlu0 %745
    %747 = vrot.lane.b32.xlu0 %v595, 18
    %v748 = vpop.permute.xlu0 %747
    %vm749 = vcmask 146432
    %v750 = vsel %vm749, %v728, %v730
    %v751 = vsel %vm749, %v730, %v732
    %v752 = vsel %vm749, %v732, %v734
    %v753 = vsel %vm749, %v734, %v736
    %v754 = vsel %vm749, %v736, %v738
    %v755 = vsel %vm749, %v728, %v740
    %v756 = vsel %vm749, %v740, %v742
    %v757 = vsel %vm749, %v742, %v744
    %v758 = vsel %vm749, %v744, %v746
    %v759 = vsel %vm749, %v746, %v748
    %v771 = vsel %vm651, %v726, 0
    %773 = vmatpush.bf16.msra.mxu0 0
    %774 = vmatpush.bf16.msra.mxu0 0
    %775 = vmatpush.bf16.msra.mxu0 0
    %776 = vmatpush.bf16.msra.mxu0 0
    %777 = vmatpush.bf16.msra.mxu0 0
    %778 = vmatpush.bf16.msra.mxu0 0
    %779 = vmatpush.bf16.msra.mxu0 %v755
    %780 = vmatpush.bf16.msra.mxu0 %v750
    %781 = vmatmul.bf16.gmra.mxu0 %v771
    %v782 = vpop.f32.mrf.mxu0
    %v783 = vadd.f32 0.0, %v782
    %v784 = vpop.f32.mrf.mxu0
    %785 = vdwg.mxu0
    %786 = vmatpush.bf16.msra.mxu0 0
    %787 = vmatpush.bf16.msra.mxu0 0
    %788 = vmatpush.bf16.msra.mxu0 0
    %789 = vmatpush.bf16.msra.mxu0 0
    %790 = vmatpush.bf16.msra.mxu0 0
    %791 = vmatpush.bf16.msra.mxu0 0
    %792 = vmatpush.bf16.msra.mxu0 %v756
    %793 = vmatpush.bf16.msra.mxu0 %v751
    %794 = vmatmul.bf16.gmra.mxu0 %v771
    %v795 = vpop.f32.mrf.mxu0
    %v796 = vadd.f32 0.0, %v795
    %v797 = vpop.f32.mrf.mxu0
    %798 = vdwg.mxu0
    %799 = vmatpush.bf16.msra.mxu0 0
    %800 = vmatpush.bf16.msra.mxu0 0
    %801 = vmatpush.bf16.msra.mxu0 0
    %802 = vmatpush.bf16.msra.mxu0 0
    %803 = vmatpush.bf16.msra.mxu0 0
    %804 = vmatpush.bf16.msra.mxu0 0
    %805 = vmatpush.bf16.msra.mxu0 %v757
    %806 = vmatpush.bf16.msra.mxu0 %v752
    %807 = vmatmul.bf16.gmra.mxu0 %v771
    %v808 = vpop.f32.mrf.mxu0
    %v809 = vadd.f32 0.0, %v808
    %v810 = vpop.f32.mrf.mxu0
    %811 = vdwg.mxu0
    %812 = vmatpush.bf16.msra.mxu0 0
    %813 = vmatpush.bf16.msra.mxu0 0
    %814 = vmatpush.bf16.msra.mxu0 0
    %815 = vmatpush.bf16.msra.mxu0 0
    %816 = vmatpush.bf16.msra.mxu0 0
    %817 = vmatpush.bf16.msra.mxu0 0
    %818 = vmatpush.bf16.msra.mxu0 %v758
    %819 = vmatpush.bf16.msra.mxu0 %v753
    %820 = vmatmul.bf16.gmra.mxu0 %v771
    %v821 = vpop.f32.mrf.mxu0
    %v822 = vadd.f32 0.0, %v821
    %v823 = vpop.f32.mrf.mxu0
    %824 = vdwg.mxu0
    %825 = vmatpush.bf16.msra.mxu0 0
    %826 = vmatpush.bf16.msra.mxu0 0
    %827 = vmatpush.bf16.msra.mxu0 0
    %828 = vmatpush.bf16.msra.mxu0 0
    %829 = vmatpush.bf16.msra.mxu0 0
    %830 = vmatpush.bf16.msra.mxu0 0
    %831 = vmatpush.bf16.msra.mxu0 %v759
    %832 = vmatpush.bf16.msra.mxu0 %v754
    %833 = vmatmul.bf16.gmra.mxu0 %v771
    %v834 = vpop.f32.mrf.mxu0
    %v835 = vadd.f32 0.0, %v834
    %v836 = vpop.f32.mrf.mxu0
    %837 = vdwg.mxu0
    %v838 = vadd.f32 %v720, %v783
    %v839 = vadd.f32 %v721, %v796
    %v840 = vadd.f32 %v722, %v809
    %v841 = vadd.f32 %v723, %v822
    %v842 = vadd.f32 %v724, %v835
    %s843 = scalar_lea.vmem %s3, 8
    %v844 = vld [vmem:[%s843] sm:$0xf]
    %845 = vrot.lane.b32.xlu0 0, 17
    %v846 = vpop.permute.xlu0 %845
    %847 = vrot.lane.b32.xlu0 %v586, 17
    %v848 = vpop.permute.xlu0 %847
    %849 = vrot.lane.b32.xlu0 %v587, 17
    %v850 = vpop.permute.xlu0 %849
    %851 = vrot.lane.b32.xlu0 %v588, 17
    %v852 = vpop.permute.xlu0 %851
    %853 = vrot.lane.b32.xlu0 %v589, 17
    %v854 = vpop.permute.xlu0 %853
    %855 = vrot.lane.b32.xlu0 %v590, 17
    %v856 = vpop.permute.xlu0 %855
    %857 = vrot.lane.b32.xlu0 %v591, 17
    %v858 = vpop.permute.xlu0 %857
    %859 = vrot.lane.b32.xlu0 %v592, 17
    %v860 = vpop.permute.xlu0 %859
    %861 = vrot.lane.b32.xlu0 %v593, 17
    %v862 = vpop.permute.xlu0 %861
    %863 = vrot.lane.b32.xlu0 %v594, 17
    %v864 = vpop.permute.xlu0 %863
    %865 = vrot.lane.b32.xlu0 %v595, 17
    %v866 = vpop.permute.xlu0 %865
    %vm867 = vcmask 138240
    %v868 = vsel %vm867, %v846, %v848
    %v869 = vsel %vm867, %v848, %v850
    %v870 = vsel %vm867, %v850, %v852
    %v871 = vsel %vm867, %v852, %v854
    %v872 = vsel %vm867, %v854, %v856
    %v873 = vsel %vm867, %v846, %v858
    %v874 = vsel %vm867, %v858, %v860
    %v875 = vsel %vm867, %v860, %v862
    %v876 = vsel %vm867, %v862, %v864
    %v877 = vsel %vm867, %v864, %v866
    %v889 = vsel %vm651, %v844, 0
    %891 = vmatpush.bf16.msra.mxu0 0
    %892 = vmatpush.bf16.msra.mxu0 0
    %893 = vmatpush.bf16.msra.mxu0 0
    %894 = vmatpush.bf16.msra.mxu0 0
    %895 = vmatpush.bf16.msra.mxu0 0
    %896 = vmatpush.bf16.msra.mxu0 0
    %897 = vmatpush.bf16.msra.mxu0 %v873
    %898 = vmatpush.bf16.msra.mxu0 %v868
    %899 = vmatmul.bf16.gmra.mxu0 %v889
    %v900 = vpop.f32.mrf.mxu0
    %v901 = vadd.f32 0.0, %v900
    %v902 = vpop.f32.mrf.mxu0
    %903 = vdwg.mxu0
    %904 = vmatpush.bf16.msra.mxu0 0
    %905 = vmatpush.bf16.msra.mxu0 0
    %906 = vmatpush.bf16.msra.mxu0 0
    %907 = vmatpush.bf16.msra.mxu0 0
    %908 = vmatpush.bf16.msra.mxu0 0
    %909 = vmatpush.bf16.msra.mxu0 0
    %910 = vmatpush.bf16.msra.mxu0 %v874
    %911 = vmatpush.bf16.msra.mxu0 %v869
    %912 = vmatmul.bf16.gmra.mxu0 %v889
    %v913 = vpop.f32.mrf.mxu0
    %v914 = vadd.f32 0.0, %v913
    %v915 = vpop.f32.mrf.mxu0
    %916 = vdwg.mxu0
    %917 = vmatpush.bf16.msra.mxu0 0
    %918 = vmatpush.bf16.msra.mxu0 0
    %919 = vmatpush.bf16.msra.mxu0 0
    %920 = vmatpush.bf16.msra.mxu0 0
    %921 = vmatpush.bf16.msra.mxu0 0
    %922 = vmatpush.bf16.msra.mxu0 0
    %923 = vmatpush.bf16.msra.mxu0 %v875
    %924 = vmatpush.bf16.msra.mxu0 %v870
    %925 = vmatmul.bf16.gmra.mxu0 %v889
    %v926 = vpop.f32.mrf.mxu0
    %v927 = vadd.f32 0.0, %v926
    %v928 = vpop.f32.mrf.mxu0
    %929 = vdwg.mxu0
    %930 = vmatpush.bf16.msra.mxu0 0
    %931 = vmatpush.bf16.msra.mxu0 0
    %932 = vmatpush.bf16.msra.mxu0 0
    %933 = vmatpush.bf16.msra.mxu0 0
    %934 = vmatpush.bf16.msra.mxu0 0
    %935 = vmatpush.bf16.msra.mxu0 0
    %936 = vmatpush.bf16.msra.mxu0 %v876
    %937 = vmatpush.bf16.msra.mxu0 %v871
    %938 = vmatmul.bf16.gmra.mxu0 %v889
    %v939 = vpop.f32.mrf.mxu0
    %v940 = vadd.f32 0.0, %v939
    %v941 = vpop.f32.mrf.mxu0
    %942 = vdwg.mxu0
    %943 = vmatpush.bf16.msra.mxu0 0
    %944 = vmatpush.bf16.msra.mxu0 0
    %945 = vmatpush.bf16.msra.mxu0 0
    %946 = vmatpush.bf16.msra.mxu0 0
    %947 = vmatpush.bf16.msra.mxu0 0
    %948 = vmatpush.bf16.msra.mxu0 0
    %949 = vmatpush.bf16.msra.mxu0 %v877
    %950 = vmatpush.bf16.msra.mxu0 %v872
    %951 = vmatmul.bf16.gmra.mxu0 %v889
    %v952 = vpop.f32.mrf.mxu0
    %v953 = vadd.f32 0.0, %v952
    %v954 = vpop.f32.mrf.mxu0
    %955 = vdwg.mxu0
    %v956 = vadd.f32 %v838, %v901
    %v957 = vadd.f32 %v839, %v914
    %v958 = vadd.f32 %v840, %v927
    %v959 = vadd.f32 %v841, %v940
    %v960 = vadd.f32 %v842, %v953
    %s961 = scalar_lea.vmem %s3, 12
    %v962 = vld [vmem:[%s961] sm:$0xf]
    %963 = vrot.lane.b32.xlu0 0, 1
    %v964 = vpop.permute.xlu0 %963
    %965 = vrot.lane.b32.xlu0 %v586, 1
    %v966 = vpop.permute.xlu0 %965
    %967 = vrot.lane.b32.xlu0 %v587, 1
    %v968 = vpop.permute.xlu0 %967
    %969 = vrot.lane.b32.xlu0 %v588, 1
    %v970 = vpop.permute.xlu0 %969
    %971 = vrot.lane.b32.xlu0 %v589, 1
    %v972 = vpop.permute.xlu0 %971
    %973 = vrot.lane.b32.xlu0 %v590, 1
    %v974 = vpop.permute.xlu0 %973
    %975 = vrot.lane.b32.xlu0 %v591, 1
    %v976 = vpop.permute.xlu0 %975
    %977 = vrot.lane.b32.xlu0 %v592, 1
    %v978 = vpop.permute.xlu0 %977
    %979 = vrot.lane.b32.xlu0 %v593, 1
    %v980 = vpop.permute.xlu0 %979
    %981 = vrot.lane.b32.xlu0 %v594, 1
    %v982 = vpop.permute.xlu0 %981
    %983 = vrot.lane.b32.xlu0 %v595, 1
    %v984 = vpop.permute.xlu0 %983
    %vm985 = vcmask 7168
    %v986 = vsel %vm985, %v964, %v966
    %v987 = vsel %vm985, %v966, %v968
    %v988 = vsel %vm985, %v968, %v970
    %v989 = vsel %vm985, %v970, %v972
    %v990 = vsel %vm985, %v972, %v974
    %v991 = vsel %vm985, %v964, %v976
    %v992 = vsel %vm985, %v976, %v978
    %v993 = vsel %vm985, %v978, %v980
    %v994 = vsel %vm985, %v980, %v982
    %v995 = vsel %vm985, %v982, %v984
    %v1007 = vsel %vm651, %v962, 0
    %1009 = vmatpush.bf16.msra.mxu0 0
    %1010 = vmatpush.bf16.msra.mxu0 0
    %1011 = vmatpush.bf16.msra.mxu0 0
    %1012 = vmatpush.bf16.msra.mxu0 0
    %1013 = vmatpush.bf16.msra.mxu0 0
    %1014 = vmatpush.bf16.msra.mxu0 0
    %1015 = vmatpush.bf16.msra.mxu0 %v991
    %1016 = vmatpush.bf16.msra.mxu0 %v986
    %1017 = vmatmul.bf16.gmra.mxu0 %v1007
    %v1018 = vpop.f32.mrf.mxu0
    %v1019 = vadd.f32 0.0, %v1018
    %v1020 = vpop.f32.mrf.mxu0
    %1021 = vdwg.mxu0
    %1022 = vmatpush.bf16.msra.mxu0 0
    %1023 = vmatpush.bf16.msra.mxu0 0
    %1024 = vmatpush.bf16.msra.mxu0 0
    %1025 = vmatpush.bf16.msra.mxu0 0
    %1026 = vmatpush.bf16.msra.mxu0 0
    %1027 = vmatpush.bf16.msra.mxu0 0
    %1028 = vmatpush.bf16.msra.mxu0 %v992
    %1029 = vmatpush.bf16.msra.mxu0 %v987
    %1030 = vmatmul.bf16.gmra.mxu0 %v1007
    %v1031 = vpop.f32.mrf.mxu0
    %v1032 = vadd.f32 0.0, %v1031
    %v1033 = vpop.f32.mrf.mxu0
    %1034 = vdwg.mxu0
    %1035 = vmatpush.bf16.msra.mxu0 0
    %1036 = vmatpush.bf16.msra.mxu0 0
    %1037 = vmatpush.bf16.msra.mxu0 0
    %1038 = vmatpush.bf16.msra.mxu0 0
    %1039 = vmatpush.bf16.msra.mxu0 0
    %1040 = vmatpush.bf16.msra.mxu0 0
    %1041 = vmatpush.bf16.msra.mxu0 %v993
    %1042 = vmatpush.bf16.msra.mxu0 %v988
    %1043 = vmatmul.bf16.gmra.mxu0 %v1007
    %v1044 = vpop.f32.mrf.mxu0
    %v1045 = vadd.f32 0.0, %v1044
    %v1046 = vpop.f32.mrf.mxu0
    %1047 = vdwg.mxu0
    %1048 = vmatpush.bf16.msra.mxu0 0
    %1049 = vmatpush.bf16.msra.mxu0 0
    %1050 = vmatpush.bf16.msra.mxu0 0
    %1051 = vmatpush.bf16.msra.mxu0 0
    %1052 = vmatpush.bf16.msra.mxu0 0
    %1053 = vmatpush.bf16.msra.mxu0 0
    %1054 = vmatpush.bf16.msra.mxu0 %v994
    %1055 = vmatpush.bf16.msra.mxu0 %v989
    %1056 = vmatmul.bf16.gmra.mxu0 %v1007
    %v1057 = vpop.f32.mrf.mxu0
    %v1058 = vadd.f32 0.0, %v1057
    %v1059 = vpop.f32.mrf.mxu0
    %1060 = vdwg.mxu0
    %1061 = vmatpush.bf16.msra.mxu0 0
    %1062 = vmatpush.bf16.msra.mxu0 0
    %1063 = vmatpush.bf16.msra.mxu0 0
    %1064 = vmatpush.bf16.msra.mxu0 0
    %1065 = vmatpush.bf16.msra.mxu0 0
    %1066 = vmatpush.bf16.msra.mxu0 0
    %1067 = vmatpush.bf16.msra.mxu0 %v995
    %1068 = vmatpush.bf16.msra.mxu0 %v990
    %1069 = vmatmul.bf16.gmra.mxu0 %v1007
    %v1070 = vpop.f32.mrf.mxu0
    %v1071 = vadd.f32 0.0, %v1070
    %v1072 = vpop.f32.mrf.mxu0
    %1073 = vdwg.mxu0
    %v1074 = vadd.f32 %v956, %v1019
    %v1075 = vadd.f32 %v957, %v1032
    %v1076 = vadd.f32 %v958, %v1045
    %v1077 = vadd.f32 %v959, %v1058
    %v1078 = vadd.f32 %v960, %v1071
    %s1079 = scalar_lea.vmem %s3, 16
    %v1080 = vld [vmem:[%s1079] sm:$0xf]
    %v1082 = vsel %vm651, %v1080, 0
    %1084 = vmatpush.bf16.msra.mxu0 0
    %1085 = vmatpush.bf16.msra.mxu0 0
    %1086 = vmatpush.bf16.msra.mxu0 0
    %1087 = vmatpush.bf16.msra.mxu0 0
    %1088 = vmatpush.bf16.msra.mxu0 0
    %1089 = vmatpush.bf16.msra.mxu0 0
    %1090 = vmatpush.bf16.msra.mxu0 %v591
    %1091 = vmatpush.bf16.msra.mxu0 %v586
    %1092 = vmatmul.bf16.gmra.mxu0 %v1082
    %v1093 = vpop.f32.mrf.mxu0
    %v1094 = vadd.f32 0.0, %v1093
    %v1095 = vpop.f32.mrf.mxu0
    %1096 = vdwg.mxu0
    %1097 = vmatpush.bf16.msra.mxu0 0
    %1098 = vmatpush.bf16.msra.mxu0 0
    %1099 = vmatpush.bf16.msra.mxu0 0
    %1100 = vmatpush.bf16.msra.mxu0 0
    %1101 = vmatpush.bf16.msra.mxu0 0
    %1102 = vmatpush.bf16.msra.mxu0 0
    %1103 = vmatpush.bf16.msra.mxu0 %v592
    %1104 = vmatpush.bf16.msra.mxu0 %v587
    %1105 = vmatmul.bf16.gmra.mxu0 %v1082
    %v1106 = vpop.f32.mrf.mxu0
    %v1107 = vadd.f32 0.0, %v1106
    %v1108 = vpop.f32.mrf.mxu0
    %1109 = vdwg.mxu0
    %1110 = vmatpush.bf16.msra.mxu0 0
    %1111 = vmatpush.bf16.msra.mxu0 0
    %1112 = vmatpush.bf16.msra.mxu0 0
    %1113 = vmatpush.bf16.msra.mxu0 0
    %1114 = vmatpush.bf16.msra.mxu0 0
    %1115 = vmatpush.bf16.msra.mxu0 0
    %1116 = vmatpush.bf16.msra.mxu0 %v593
    %1117 = vmatpush.bf16.msra.mxu0 %v588
    %1118 = vmatmul.bf16.gmra.mxu0 %v1082
    %v1119 = vpop.f32.mrf.mxu0
    %v1120 = vadd.f32 0.0, %v1119
    %v1121 = vpop.f32.mrf.mxu0
    %1122 = vdwg.mxu0
    %1123 = vmatpush.bf16.msra.mxu0 0
    %1124 = vmatpush.bf16.msra.mxu0 0
    %1125 = vmatpush.bf16.msra.mxu0 0
    %1126 = vmatpush.bf16.msra.mxu0 0
    %1127 = vmatpush.bf16.msra.mxu0 0
    %1128 = vmatpush.bf16.msra.mxu0 0
    %1129 = vmatpush.bf16.msra.mxu0 %v594
    %1130 = vmatpush.bf16.msra.mxu0 %v589
    %1131 = vmatmul.bf16.gmra.mxu0 %v1082
    %v1132 = vpop.f32.mrf.mxu0
    %v1133 = vadd.f32 0.0, %v1132
    %v1134 = vpop.f32.mrf.mxu0
    %1135 = vdwg.mxu0
    %1136 = vmatpush.bf16.msra.mxu0 0
    %1137 = vmatpush.bf16.msra.mxu0 0
    %1138 = vmatpush.bf16.msra.mxu0 0
    %1139 = vmatpush.bf16.msra.mxu0 0
    %1140 = vmatpush.bf16.msra.mxu0 0
    %1141 = vmatpush.bf16.msra.mxu0 0
    %1142 = vmatpush.bf16.msra.mxu0 %v595
    %1143 = vmatpush.bf16.msra.mxu0 %v590
    %1144 = vmatmul.bf16.gmra.mxu0 %v1082
    %v1145 = vpop.f32.mrf.mxu0
    %v1146 = vadd.f32 0.0, %v1145
    %v1147 = vpop.f32.mrf.mxu0
    %1148 = vdwg.mxu0
    %v1149 = vadd.f32 %v1074, %v1094
    %v1150 = vadd.f32 %v1075, %v1107
    %v1151 = vadd.f32 %v1076, %v1120
    %v1152 = vadd.f32 %v1077, %v1133
    %v1153 = vadd.f32 %v1078, %v1146
    %s1154 = scalar_lea.vmem %s3, 20
    %v1155 = vld [vmem:[%s1154] sm:$0xf]
    %1156 = vrot.lane.b32.xlu0 %v586, 127
    %v1157 = vpop.permute.xlu0 %1156
    %1158 = vrot.lane.b32.xlu0 %v587, 127
    %v1159 = vpop.permute.xlu0 %1158
    %1160 = vrot.lane.b32.xlu0 %v588, 127
    %v1161 = vpop.permute.xlu0 %1160
    %1162 = vrot.lane.b32.xlu0 %v589, 127
    %v1163 = vpop.permute.xlu0 %1162
    %1164 = vrot.lane.b32.xlu0 %v590, 127
    %v1165 = vpop.permute.xlu0 %1164
    %1166 = vrot.lane.b32.xlu0 0, 127
    %v1167 = vpop.permute.xlu0 %1166
    %1168 = vrot.lane.b32.xlu0 %v591, 127
    %v1169 = vpop.permute.xlu0 %1168
    %1170 = vrot.lane.b32.xlu0 %v592, 127
    %v1171 = vpop.permute.xlu0 %1170
    %1172 = vrot.lane.b32.xlu0 %v593, 127
    %v1173 = vpop.permute.xlu0 %1172
    %1174 = vrot.lane.b32.xlu0 %v594, 127
    %v1175 = vpop.permute.xlu0 %1174
    %1176 = vrot.lane.b32.xlu0 %v595, 127
    %v1177 = vpop.permute.xlu0 %1176
    %vm1178 = vcmask 1039360
    %v1179 = vsel %vm1178, %v1157, %v1159
    %v1180 = vsel %vm1178, %v1159, %v1161
    %v1181 = vsel %vm1178, %v1161, %v1163
    %v1182 = vsel %vm1178, %v1163, %v1165
    %v1183 = vsel %vm1178, %v1165, %v1167
    %v1184 = vsel %vm1178, %v1169, %v1171
    %v1185 = vsel %vm1178, %v1171, %v1173
    %v1186 = vsel %vm1178, %v1173, %v1175
    %v1187 = vsel %vm1178, %v1175, %v1177
    %v1188 = vsel %vm1178, %v1177, %v1167
    %v1200 = vsel %vm651, %v1155, 0
    %1202 = vmatpush.bf16.msra.mxu0 0
    %1203 = vmatpush.bf16.msra.mxu0 0
    %1204 = vmatpush.bf16.msra.mxu0 0
    %1205 = vmatpush.bf16.msra.mxu0 0
    %1206 = vmatpush.bf16.msra.mxu0 0
    %1207 = vmatpush.bf16.msra.mxu0 0
    %1208 = vmatpush.bf16.msra.mxu0 %v1184
    %1209 = vmatpush.bf16.msra.mxu0 %v1179
    %1210 = vmatmul.bf16.gmra.mxu0 %v1200
    %v1211 = vpop.f32.mrf.mxu0
    %v1212 = vadd.f32 0.0, %v1211
    %v1213 = vpop.f32.mrf.mxu0
    %1214 = vdwg.mxu0
    %1215 = vmatpush.bf16.msra.mxu0 0
    %1216 = vmatpush.bf16.msra.mxu0 0
    %1217 = vmatpush.bf16.msra.mxu0 0
    %1218 = vmatpush.bf16.msra.mxu0 0
    %1219 = vmatpush.bf16.msra.mxu0 0
    %1220 = vmatpush.bf16.msra.mxu0 0
    %1221 = vmatpush.bf16.msra.mxu0 %v1185
    %1222 = vmatpush.bf16.msra.mxu0 %v1180
    %1223 = vmatmul.bf16.gmra.mxu0 %v1200
    %v1224 = vpop.f32.mrf.mxu0
    %v1225 = vadd.f32 0.0, %v1224
    %v1226 = vpop.f32.mrf.mxu0
    %1227 = vdwg.mxu0
    %1228 = vmatpush.bf16.msra.mxu0 0
    %1229 = vmatpush.bf16.msra.mxu0 0
    %1230 = vmatpush.bf16.msra.mxu0 0
    %1231 = vmatpush.bf16.msra.mxu0 0
    %1232 = vmatpush.bf16.msra.mxu0 0
    %1233 = vmatpush.bf16.msra.mxu0 0
    %1234 = vmatpush.bf16.msra.mxu0 %v1186
    %1235 = vmatpush.bf16.msra.mxu0 %v1181
    %1236 = vmatmul.bf16.gmra.mxu0 %v1200
    %v1237 = vpop.f32.mrf.mxu0
    %v1238 = vadd.f32 0.0, %v1237
    %v1239 = vpop.f32.mrf.mxu0
    %1240 = vdwg.mxu0
    %1241 = vmatpush.bf16.msra.mxu0 0
    %1242 = vmatpush.bf16.msra.mxu0 0
    %1243 = vmatpush.bf16.msra.mxu0 0
    %1244 = vmatpush.bf16.msra.mxu0 0
    %1245 = vmatpush.bf16.msra.mxu0 0
    %1246 = vmatpush.bf16.msra.mxu0 0
    %1247 = vmatpush.bf16.msra.mxu0 %v1187
    %1248 = vmatpush.bf16.msra.mxu0 %v1182
    %1249 = vmatmul.bf16.gmra.mxu0 %v1200
    %v1250 = vpop.f32.mrf.mxu0
    %v1251 = vadd.f32 0.0, %v1250
    %v1252 = vpop.f32.mrf.mxu0
    %1253 = vdwg.mxu0
    %1254 = vmatpush.bf16.msra.mxu0 0
    %1255 = vmatpush.bf16.msra.mxu0 0
    %1256 = vmatpush.bf16.msra.mxu0 0
    %1257 = vmatpush.bf16.msra.mxu0 0
    %1258 = vmatpush.bf16.msra.mxu0 0
    %1259 = vmatpush.bf16.msra.mxu0 0
    %1260 = vmatpush.bf16.msra.mxu0 %v1188
    %1261 = vmatpush.bf16.msra.mxu0 %v1183
    %1262 = vmatmul.bf16.gmra.mxu0 %v1200
    %v1263 = vpop.f32.mrf.mxu0
    %v1264 = vadd.f32 0.0, %v1263
    %v1265 = vpop.f32.mrf.mxu0
    %1266 = vdwg.mxu0
    %v1267 = vadd.f32 %v1149, %v1212
    %v1268 = vadd.f32 %v1150, %v1225
    %v1269 = vadd.f32 %v1151, %v1238
    %v1270 = vadd.f32 %v1152, %v1251
    %v1271 = vadd.f32 %v1153, %v1264
    %s1272 = scalar_lea.vmem %s3, 24
    %v1273 = vld [vmem:[%s1272] sm:$0xf]
    %1274 = vrot.lane.b32.xlu0 %v586, 111
    %v1275 = vpop.permute.xlu0 %1274
    %1276 = vrot.lane.b32.xlu0 %v587, 111
    %v1277 = vpop.permute.xlu0 %1276
    %1278 = vrot.lane.b32.xlu0 %v588, 111
    %v1279 = vpop.permute.xlu0 %1278
    %1280 = vrot.lane.b32.xlu0 %v589, 111
    %v1281 = vpop.permute.xlu0 %1280
    %1282 = vrot.lane.b32.xlu0 %v590, 111
    %v1283 = vpop.permute.xlu0 %1282
    %1284 = vrot.lane.b32.xlu0 0, 111
    %v1285 = vpop.permute.xlu0 %1284
    %1286 = vrot.lane.b32.xlu0 %v591, 111
    %v1287 = vpop.permute.xlu0 %1286
    %1288 = vrot.lane.b32.xlu0 %v592, 111
    %v1289 = vpop.permute.xlu0 %1288
    %1290 = vrot.lane.b32.xlu0 %v593, 111
    %v1291 = vpop.permute.xlu0 %1290
    %1292 = vrot.lane.b32.xlu0 %v594, 111
    %v1293 = vpop.permute.xlu0 %1292
    %1294 = vrot.lane.b32.xlu0 %v595, 111
    %v1295 = vpop.permute.xlu0 %1294
    %vm1296 = vcmask 908288
    %v1297 = vsel %vm1296, %v1275, %v1277
    %v1298 = vsel %vm1296, %v1277, %v1279
    %v1299 = vsel %vm1296, %v1279, %v1281
    %v1300 = vsel %vm1296, %v1281, %v1283
    %v1301 = vsel %vm1296, %v1283, %v1285
    %v1302 = vsel %vm1296, %v1287, %v1289
    %v1303 = vsel %vm1296, %v1289, %v1291
    %v1304 = vsel %vm1296, %v1291, %v1293
    %v1305 = vsel %vm1296, %v1293, %v1295
    %v1306 = vsel %vm1296, %v1295, %v1285
    %v1318 = vsel %vm651, %v1273, 0
    %1320 = vmatpush.bf16.msra.mxu0 0
    %1321 = vmatpush.bf16.msra.mxu0 0
    %1322 = vmatpush.bf16.msra.mxu0 0
    %1323 = vmatpush.bf16.msra.mxu0 0
    %1324 = vmatpush.bf16.msra.mxu0 0
    %1325 = vmatpush.bf16.msra.mxu0 0
    %1326 = vmatpush.bf16.msra.mxu0 %v1302
    %1327 = vmatpush.bf16.msra.mxu0 %v1297
    %1328 = vmatmul.bf16.gmra.mxu0 %v1318
    %v1329 = vpop.f32.mrf.mxu0
    %v1330 = vadd.f32 0.0, %v1329
    %v1331 = vpop.f32.mrf.mxu0
    %1332 = vdwg.mxu0
    %1333 = vmatpush.bf16.msra.mxu0 0
    %1334 = vmatpush.bf16.msra.mxu0 0
    %1335 = vmatpush.bf16.msra.mxu0 0
    %1336 = vmatpush.bf16.msra.mxu0 0
    %1337 = vmatpush.bf16.msra.mxu0 0
    %1338 = vmatpush.bf16.msra.mxu0 0
    %1339 = vmatpush.bf16.msra.mxu0 %v1303
    %1340 = vmatpush.bf16.msra.mxu0 %v1298
    %1341 = vmatmul.bf16.gmra.mxu0 %v1318
    %v1342 = vpop.f32.mrf.mxu0
    %v1343 = vadd.f32 0.0, %v1342
    %v1344 = vpop.f32.mrf.mxu0
    %1345 = vdwg.mxu0
    %1346 = vmatpush.bf16.msra.mxu0 0
    %1347 = vmatpush.bf16.msra.mxu0 0
    %1348 = vmatpush.bf16.msra.mxu0 0
    %1349 = vmatpush.bf16.msra.mxu0 0
    %1350 = vmatpush.bf16.msra.mxu0 0
    %1351 = vmatpush.bf16.msra.mxu0 0
    %1352 = vmatpush.bf16.msra.mxu0 %v1304
    %1353 = vmatpush.bf16.msra.mxu0 %v1299
    %1354 = vmatmul.bf16.gmra.mxu0 %v1318
    %v1355 = vpop.f32.mrf.mxu0
    %v1356 = vadd.f32 0.0, %v1355
    %v1357 = vpop.f32.mrf.mxu0
    %1358 = vdwg.mxu0
    %1359 = vmatpush.bf16.msra.mxu0 0
    %1360 = vmatpush.bf16.msra.mxu0 0
    %1361 = vmatpush.bf16.msra.mxu0 0
    %1362 = vmatpush.bf16.msra.mxu0 0
    %1363 = vmatpush.bf16.msra.mxu0 0
    %1364 = vmatpush.bf16.msra.mxu0 0
    %1365 = vmatpush.bf16.msra.mxu0 %v1305
    %1366 = vmatpush.bf16.msra.mxu0 %v1300
    %1367 = vmatmul.bf16.gmra.mxu0 %v1318
    %v1368 = vpop.f32.mrf.mxu0
    %v1369 = vadd.f32 0.0, %v1368
    %v1370 = vpop.f32.mrf.mxu0
    %1371 = vdwg.mxu0
    %1372 = vmatpush.bf16.msra.mxu0 0
    %1373 = vmatpush.bf16.msra.mxu0 0
    %1374 = vmatpush.bf16.msra.mxu0 0
    %1375 = vmatpush.bf16.msra.mxu0 0
    %1376 = vmatpush.bf16.msra.mxu0 0
    %1377 = vmatpush.bf16.msra.mxu0 0
    %1378 = vmatpush.bf16.msra.mxu0 %v1306
    %1379 = vmatpush.bf16.msra.mxu0 %v1301
    %1380 = vmatmul.bf16.gmra.mxu0 %v1318
    %v1381 = vpop.f32.mrf.mxu0
    %v1382 = vadd.f32 0.0, %v1381
    %v1383 = vpop.f32.mrf.mxu0
    %1384 = vdwg.mxu0
    %v1385 = vadd.f32 %v1267, %v1330
    %v1386 = vadd.f32 %v1268, %v1343
    %v1387 = vadd.f32 %v1269, %v1356
    %v1388 = vadd.f32 %v1270, %v1369
    %v1389 = vadd.f32 %v1271, %v1382
    %s1390 = scalar_lea.vmem %s3, 28
    %v1391 = vld [vmem:[%s1390] sm:$0xf]
    %1392 = vrot.lane.b32.xlu0 %v586, 110
    %v1393 = vpop.permute.xlu0 %1392
    %1394 = vrot.lane.b32.xlu0 %v587, 110
    %v1395 = vpop.permute.xlu0 %1394
    %1396 = vrot.lane.b32.xlu0 %v588, 110
    %v1397 = vpop.permute.xlu0 %1396
    %1398 = vrot.lane.b32.xlu0 %v589, 110
    %v1399 = vpop.permute.xlu0 %1398
    %1400 = vrot.lane.b32.xlu0 %v590, 110
    %v1401 = vpop.permute.xlu0 %1400
    %1402 = vrot.lane.b32.xlu0 0, 110
    %v1403 = vpop.permute.xlu0 %1402
    %1404 = vrot.lane.b32.xlu0 %v591, 110
    %v1405 = vpop.permute.xlu0 %1404
    %1406 = vrot.lane.b32.xlu0 %v592, 110
    %v1407 = vpop.permute.xlu0 %1406
    %1408 = vrot.lane.b32.xlu0 %v593, 110
    %v1409 = vpop.permute.xlu0 %1408
    %1410 = vrot.lane.b32.xlu0 %v594, 110
    %v1411 = vpop.permute.xlu0 %1410
    %1412 = vrot.lane.b32.xlu0 %v595, 110
    %v1413 = vpop.permute.xlu0 %1412
    %vm1414 = vcmask 900096
    %v1415 = vsel %vm1414, %v1393, %v1395
    %v1416 = vsel %vm1414, %v1395, %v1397
    %v1417 = vsel %vm1414, %v1397, %v1399
    %v1418 = vsel %vm1414, %v1399, %v1401
    %v1419 = vsel %vm1414, %v1401, %v1403
    %v1420 = vsel %vm1414, %v1405, %v1407
    %v1421 = vsel %vm1414, %v1407, %v1409
    %v1422 = vsel %vm1414, %v1409, %v1411
    %v1423 = vsel %vm1414, %v1411, %v1413
    %v1424 = vsel %vm1414, %v1413, %v1403
    %v1436 = vsel %vm651, %v1391, 0
    %1438 = vmatpush.bf16.msra.mxu0 0
    %1439 = vmatpush.bf16.msra.mxu0 0
    %1440 = vmatpush.bf16.msra.mxu0 0
    %1441 = vmatpush.bf16.msra.mxu0 0
    %1442 = vmatpush.bf16.msra.mxu0 0
    %1443 = vmatpush.bf16.msra.mxu0 0
    %1444 = vmatpush.bf16.msra.mxu0 %v1420
    %1445 = vmatpush.bf16.msra.mxu0 %v1415
    %1446 = vmatmul.bf16.gmra.mxu0 %v1436
    %v1447 = vpop.f32.mrf.mxu0
    %v1448 = vadd.f32 0.0, %v1447
    %v1449 = vpop.f32.mrf.mxu0
    %1450 = vdwg.mxu0
    %1451 = vmatpush.bf16.msra.mxu0 0
    %1452 = vmatpush.bf16.msra.mxu0 0
    %1453 = vmatpush.bf16.msra.mxu0 0
    %1454 = vmatpush.bf16.msra.mxu0 0
    %1455 = vmatpush.bf16.msra.mxu0 0
    %1456 = vmatpush.bf16.msra.mxu0 0
    %1457 = vmatpush.bf16.msra.mxu0 %v1421
    %1458 = vmatpush.bf16.msra.mxu0 %v1416
    %1459 = vmatmul.bf16.gmra.mxu0 %v1436
    %v1460 = vpop.f32.mrf.mxu0
    %v1461 = vadd.f32 0.0, %v1460
    %v1462 = vpop.f32.mrf.mxu0
    %1463 = vdwg.mxu0
    %1464 = vmatpush.bf16.msra.mxu0 0
    %1465 = vmatpush.bf16.msra.mxu0 0
    %1466 = vmatpush.bf16.msra.mxu0 0
    %1467 = vmatpush.bf16.msra.mxu0 0
    %1468 = vmatpush.bf16.msra.mxu0 0
    %1469 = vmatpush.bf16.msra.mxu0 0
    %1470 = vmatpush.bf16.msra.mxu0 %v1422
    %1471 = vmatpush.bf16.msra.mxu0 %v1417
    %1472 = vmatmul.bf16.gmra.mxu0 %v1436
    %v1473 = vpop.f32.mrf.mxu0
    %v1474 = vadd.f32 0.0, %v1473
    %v1475 = vpop.f32.mrf.mxu0
    %1476 = vdwg.mxu0
    %1477 = vmatpush.bf16.msra.mxu0 0
    %1478 = vmatpush.bf16.msra.mxu0 0
    %1479 = vmatpush.bf16.msra.mxu0 0
    %1480 = vmatpush.bf16.msra.mxu0 0
    %1481 = vmatpush.bf16.msra.mxu0 0
    %1482 = vmatpush.bf16.msra.mxu0 0
    %1483 = vmatpush.bf16.msra.mxu0 %v1423
    %1484 = vmatpush.bf16.msra.mxu0 %v1418
    %1485 = vmatmul.bf16.gmra.mxu0 %v1436
    %v1486 = vpop.f32.mrf.mxu0
    %v1487 = vadd.f32 0.0, %v1486
    %v1488 = vpop.f32.mrf.mxu0
    %1489 = vdwg.mxu0
    %1490 = vmatpush.bf16.msra.mxu0 0
    %1491 = vmatpush.bf16.msra.mxu0 0
    %1492 = vmatpush.bf16.msra.mxu0 0
    %1493 = vmatpush.bf16.msra.mxu0 0
    %1494 = vmatpush.bf16.msra.mxu0 0
    %1495 = vmatpush.bf16.msra.mxu0 0
    %1496 = vmatpush.bf16.msra.mxu0 %v1424
    %1497 = vmatpush.bf16.msra.mxu0 %v1419
    %1498 = vmatmul.bf16.gmra.mxu0 %v1436
    %v1499 = vpop.f32.mrf.mxu0
    %v1500 = vadd.f32 0.0, %v1499
    %v1501 = vpop.f32.mrf.mxu0
    %1502 = vdwg.mxu0
    %v1503 = vadd.f32 %v1385, %v1448
    %v1504 = vadd.f32 %v1386, %v1461
    %v1505 = vadd.f32 %v1387, %v1474
    %v1506 = vadd.f32 %v1388, %v1487
    %v1507 = vadd.f32 %v1389, %v1500
    %s1508 = scalar_lea.vmem %s3, 32
    %v1509 = vld [vmem:[%s1508] sm:$0xf]
    %1510 = vrot.lane.b32.xlu0 %v586, 109
    %v1511 = vpop.permute.xlu0 %1510
    %1512 = vrot.lane.b32.xlu0 %v587, 109
    %v1513 = vpop.permute.xlu0 %1512
    %1514 = vrot.lane.b32.xlu0 %v588, 109
    %v1515 = vpop.permute.xlu0 %1514
    %1516 = vrot.lane.b32.xlu0 %v589, 109
    %v1517 = vpop.permute.xlu0 %1516
    %1518 = vrot.lane.b32.xlu0 %v590, 109
    %v1519 = vpop.permute.xlu0 %1518
    %1520 = vrot.lane.b32.xlu0 0, 109
    %v1521 = vpop.permute.xlu0 %1520
    %1522 = vrot.lane.b32.xlu0 %v591, 109
    %v1523 = vpop.permute.xlu0 %1522
    %1524 = vrot.lane.b32.xlu0 %v592, 109
    %v1525 = vpop.permute.xlu0 %1524
    %1526 = vrot.lane.b32.xlu0 %v593, 109
    %v1527 = vpop.permute.xlu0 %1526
    %1528 = vrot.lane.b32.xlu0 %v594, 109
    %v1529 = vpop.permute.xlu0 %1528
    %1530 = vrot.lane.b32.xlu0 %v595, 109
    %v1531 = vpop.permute.xlu0 %1530
    %vm1532 = vcmask 891904
    %v1533 = vsel %vm1532, %v1511, %v1513
    %v1534 = vsel %vm1532, %v1513, %v1515
    %v1535 = vsel %vm1532, %v1515, %v1517
    %v1536 = vsel %vm1532, %v1517, %v1519
    %v1537 = vsel %vm1532, %v1519, %v1521
    %v1538 = vsel %vm1532, %v1523, %v1525
    %v1539 = vsel %vm1532, %v1525, %v1527
    %v1540 = vsel %vm1532, %v1527, %v1529
    %v1541 = vsel %vm1532, %v1529, %v1531
    %v1542 = vsel %vm1532, %v1531, %v1521
    %v1554 = vsel %vm651, %v1509, 0
    %1556 = vmatpush.bf16.msra.mxu0 0
    %1557 = vmatpush.bf16.msra.mxu0 0
    %1558 = vmatpush.bf16.msra.mxu0 0
    %1559 = vmatpush.bf16.msra.mxu0 0
    %1560 = vmatpush.bf16.msra.mxu0 0
    %1561 = vmatpush.bf16.msra.mxu0 0
    %1562 = vmatpush.bf16.msra.mxu0 %v1538
    %1563 = vmatpush.bf16.msra.mxu0 %v1533
    %1564 = vmatmul.bf16.gmra.mxu0 %v1554
    %v1565 = vpop.f32.mrf.mxu0
    %v1566 = vadd.f32 0.0, %v1565
    %v1567 = vpop.f32.mrf.mxu0
    %1568 = vdwg.mxu0
    %1569 = vmatpush.bf16.msra.mxu0 0
    %1570 = vmatpush.bf16.msra.mxu0 0
    %1571 = vmatpush.bf16.msra.mxu0 0
    %1572 = vmatpush.bf16.msra.mxu0 0
    %1573 = vmatpush.bf16.msra.mxu0 0
    %1574 = vmatpush.bf16.msra.mxu0 0
    %1575 = vmatpush.bf16.msra.mxu0 %v1539
    %1576 = vmatpush.bf16.msra.mxu0 %v1534
    %1577 = vmatmul.bf16.gmra.mxu0 %v1554
    %v1578 = vpop.f32.mrf.mxu0
    %v1579 = vadd.f32 0.0, %v1578
    %v1580 = vpop.f32.mrf.mxu0
    %1581 = vdwg.mxu0
    %1582 = vmatpush.bf16.msra.mxu0 0
    %1583 = vmatpush.bf16.msra.mxu0 0
    %1584 = vmatpush.bf16.msra.mxu0 0
    %1585 = vmatpush.bf16.msra.mxu0 0
    %1586 = vmatpush.bf16.msra.mxu0 0
    %1587 = vmatpush.bf16.msra.mxu0 0
    %1588 = vmatpush.bf16.msra.mxu0 %v1540
    %1589 = vmatpush.bf16.msra.mxu0 %v1535
    %1590 = vmatmul.bf16.gmra.mxu0 %v1554
    %v1591 = vpop.f32.mrf.mxu0
    %v1592 = vadd.f32 0.0, %v1591
    %v1593 = vpop.f32.mrf.mxu0
    %1594 = vdwg.mxu0
    %1595 = vmatpush.bf16.msra.mxu0 0
    %1596 = vmatpush.bf16.msra.mxu0 0
    %1597 = vmatpush.bf16.msra.mxu0 0
    %1598 = vmatpush.bf16.msra.mxu0 0
    %1599 = vmatpush.bf16.msra.mxu0 0
    %1600 = vmatpush.bf16.msra.mxu0 0
    %1601 = vmatpush.bf16.msra.mxu0 %v1541
    %1602 = vmatpush.bf16.msra.mxu0 %v1536
    %1603 = vmatmul.bf16.gmra.mxu0 %v1554
    %v1604 = vpop.f32.mrf.mxu0
    %v1605 = vadd.f32 0.0, %v1604
    %v1606 = vpop.f32.mrf.mxu0
    %1607 = vdwg.mxu0
    %1608 = vmatpush.bf16.msra.mxu0 0
    %1609 = vmatpush.bf16.msra.mxu0 0
    %1610 = vmatpush.bf16.msra.mxu0 0
    %1611 = vmatpush.bf16.msra.mxu0 0
    %1612 = vmatpush.bf16.msra.mxu0 0
    %1613 = vmatpush.bf16.msra.mxu0 0
    %1614 = vmatpush.bf16.msra.mxu0 %v1542
    %1615 = vmatpush.bf16.msra.mxu0 %v1537
    %1616 = vmatmul.bf16.gmra.mxu0 %v1554
    %v1617 = vpop.f32.mrf.mxu0
    %v1618 = vadd.f32 0.0, %v1617
    %v1619 = vpop.f32.mrf.mxu0
    %1620 = vdwg.mxu0
    %v1621 = vadd.f32 %v1503, %v1566
    %v1622 = vadd.f32 %v1504, %v1579
    %v1623 = vadd.f32 %v1505, %v1592
    %v1624 = vadd.f32 %v1506, %v1605
    %v1625 = vadd.f32 %v1507, %v1618
    %1626 = vst [vmem:[#allocation7] sm:$0xff] %v1621
    %1627 = vst [vmem:[#allocation7 + $0x8] sm:$0xff] %v1622
    %1628 = vst [vmem:[#allocation7 + $0x10] sm:$0xff] %v1623
    %1629 = vst [vmem:[#allocation7 + $0x18] sm:$0xff] %v1624
    %1630 = vst [vmem:[#allocation7 + $0x20] sm:$0xff] %v1625
    // Predicated region
    $region34: #{tpu_custom_call.1} parent=1 // pred_check
      _
    $region35: #{tpu_custom_call.1} parent=1 // pred_check_branch
      %1632 = sbr.rel (0) target = $region37
    $region36: #{tpu_custom_call.1} parent=1 // pred_region
      %1634 = vsyncadd [#allocation4], 0
      %s1636 = sshll.u32 [#allocation7], 4
      %s1637 = int_to_ptr.vmem [resolvable:$true] %s1636
      %s1638 = sshll.u32 %s6, 4
      %s1639 = int_to_ptr.hbm [resolvable:$true] %s1638
      %1641 = dma.vmem_to_hbm [thread:$0]  %s1637, 640, %s1639, [#allocation4]
    $region37: #{tpu_custom_call.1} parent=1 // pred_fallthru
      _
    // Predicated region
    $region38: #{tpu_custom_call.1} parent=1 // pred_check
      _
    $region39: #{tpu_custom_call.1} parent=1 // pred_check_branch
      %1643 = sbr.rel (0) target = $region41
    $region40: #{tpu_custom_call.1} parent=1 // pred_region
      %1645 = dma.done [#allocation4], 640
    $region41: #{tpu_custom_call.1} parent=1 // pred_fallthru
      _
    %1646 = vsyncpa [#allocation3], 1
    %1647 = vsyncpa [#allocation6], 1
    %1648 = vsyncpa [#allocation4], 1

</llo_original>
